<compile_context>
chip_gen: v7x
topology: tpu7x:2x2x1
jax: 0.10.0
libtpu: 0.0.40
codegen_flags: <defaults>
</compile_context>

<pallas_src>
import math

import jax
import jax.numpy as jnp
from jax.experimental import pallas as pl
from jax.experimental.pallas import tpu as pltpu


# ----------------------------- Pallas kernel -----------------------------

def _ffn_kernel(x_ref, w1_ref, b1_ref, w2_ref, b2_ref, o_ref, acc_ref):
    # x_ref : (tile_m, d_model)   input dtype (cast to bf16 below)
    # w1_ref: (d_model, tile_ff)  bf16, pre-transposed nn.Linear weight chunk
    # b1_ref: (1, tile_ff)        f32
    # w2_ref: (tile_ff, d_model)  bf16, pre-transposed nn.Linear weight chunk
    # b2_ref: (1, d_model)        f32
    # o_ref : (tile_m, d_model)   input dtype
    # acc_ref: (tile_m, d_model)  f32 accumulator, resident across the d_ff axis
    j = pl.program_id(1)

    @pl.when(j == 0)
    def _init():
        acc_ref[...] = jnp.zeros_like(acc_ref)

    x = x_ref[...]
    if x.dtype != jnp.bfloat16:
        x = x.astype(jnp.bfloat16)  # bf16 MXU input; cast hides under the matmul

    # First matmul on the MXU, f32 accumulation.
    h = jnp.dot(x, w1_ref[...], preferred_element_type=jnp.float32)
    # Bias + ReLU in f32 on the VPU. Dropout is identity in eval mode.
    h = jnp.maximum(h + b1_ref[...], 0.0)
    # Second matmul: bf16 inputs, accumulate in f32 into the resident scratch.
    acc_ref[...] += jnp.dot(h.astype(jnp.bfloat16), w2_ref[...],
                            preferred_element_type=jnp.float32)

    @pl.when(j == pl.num_programs(1) - 1)
    def _finalize():
        o_ref[...] = (acc_ref[...] + b2_ref[...]).astype(o_ref.dtype)


# ----------------------------- tiling heuristics -----------------------------

def _round_up(n, m):
    return ((n + m - 1) // m) * m


def _vmem_budgets():
    """(working-set budget, vmem_limit_bytes) derived from the chip's VMEM size."""
    try:
        cap = int(pltpu.get_tpu_info().vmem_capacity_bytes)
        if cap <= 0:
            raise ValueError
    except Exception:
        cap = 64 * 1024 * 1024  # conservative fallback (v7x per-core size)
    # ~70% of physical for our tile working set, ~90% as the scoped hard limit
    # (leaves headroom for compiler-internal scratch).
    return int(cap * 0.70), int(cap * 0.90)


def _working_set_bytes(tile_m, tile_ff, n_ff_tiles, d_model, x_itemsize, out_itemsize):
    BF16, F32 = 2, 4
    wbuf = 1 if n_ff_tiles == 1 else 2  # resident weights -> single buffer
    return (
        2 * tile_m * d_model * x_itemsize        # streamed input tile (double-buffered)
        + 2 * tile_m * d_model * out_itemsize    # streamed output tile (double-buffered)
        + tile_m * d_model * F32                 # f32 accumulator scratch
        + tile_m * tile_ff * (F32 + BF16)        # h (f32) + bf16 copy for 2nd matmul
        + wbuf * 2 * d_model * tile_ff * BF16    # w1^T and w2^T chunks (bf16)
        + wbuf * tile_ff * F32                   # b1 chunk
        + d_model * F32                          # b2 (resident)
    )


def _pick_tiles(m_rows, d_model, d_ff, x_itemsize, out_itemsize, budget):
    """Choose (tile_m, tile_ff).

    tile_ff always divides d_ff exactly (it is a reduction axis: ragged blocks
    there would feed garbage into the accumulator). tile_m is a multiple of 8;
    the last M block may be ragged (Pallas masks the store and rows are
    independent).
    """
    m_cap = max(8, min(2048, _round_up(m_rows, 8)))
    ff_cands = [d_ff] + [c for c in (4096, 2048, 1024, 512, 256, 128)
                         if c < d_ff and d_ff % c == 0]

    best_fit = None   # ((tile_m, -n_ff), tile_m, tile_ff)
    smallest = None   # (working_set, tile_m, tile_ff)
    for tile_ff in ff_cands:
        n_ff = d_ff // tile_ff
        tile_m = m_cap
        while tile_m > 8 and _working_set_bytes(
                tile_m, tile_ff, n_ff, d_model, x_itemsize, out_itemsize) > budget:
            tile_m = max(8, _round_up(tile_m // 2, 8))
        ws = _working_set_bytes(tile_m, tile_ff, n_ff, d_model, x_itemsize, out_itemsize)
        if ws <= budget:
            # Prefer larger row tiles (amortize per-step overhead + streamed
            # weights), then fewer d_ff chunks (resident weights DMA'd once).
            key = (tile_m, -n_ff)
            if best_fit is None or key > best_fit[0]:
                best_fit = (key, tile_m, tile_ff)
            if n_ff == 1 and tile_m >= min(m_cap, 512):
                break  # resident weights with a big row tile: good enough
        if smallest is None or ws < smallest[0]:
            smallest = (ws, tile_m, tile_ff)

    chosen = best_fit if best_fit is not None else smallest
    return chosen[1], chosen[2]


# ----------------------------- wrapper -----------------------------

def prepare_ffn_params(w1, b1, w2, b2):
    """One-time conversion of PyTorch-layout nn.Linear params to kernel layout.

    Hoisted out of the per-call path: weights are transposed to (in, out) and
    cast to bf16 (native MXU input); biases stay f32 (they feed the f32
    accumulator path).
    """
    d_ff, d_model = w1.shape
    return dict(
        w1t=jnp.asarray(w1, jnp.bfloat16).T,            # (d_model, d_ff)
        b1=jnp.asarray(b1, jnp.float32).reshape(1, d_ff),
        w2t=jnp.asarray(w2, jnp.bfloat16).T,            # (d_ff, d_model)
        b2=jnp.asarray(b2, jnp.float32).reshape(1, d_model),
    )


def feed_forward(x, params, *, tile_m=None, tile_ff=None):
    """y = relu(x @ W1^T + b1) @ W2^T + b2 with `params` from prepare_ffn_params."""
    w1t, b1, w2t, b2 = params["w1t"], params["b1"], params["w2t"], params["b2"]
    d_model, d_ff = w1t.shape

    orig_shape = x.shape
    x2d = x.reshape(-1, d_model)
    m_rows = x2d.shape[0]
    out_dtype = x.dtype

    budget, vmem_limit = _vmem_budgets()
    auto_m, auto_ff = _pick_tiles(
        m_rows, d_model, d_ff,
        jnp.dtype(x.dtype).itemsize, jnp.dtype(out_dtype).itemsize, budget)
    if tile_m is None:
        tile_m = auto_m
    if tile_ff is None:
        tile_ff = auto_ff
    tile_m = _round_up(tile_m, 8)
    if d_ff % tile_ff != 0:
        raise ValueError("tile_ff must divide d_ff exactly (reduction axis).")

    num_m = pl.cdiv(m_rows, tile_m)   # last M block may be ragged (masked store)
    num_ff = d_ff // tile_ff
    resident = num_ff == 1            # weights constant across the whole grid

    def build(use_single_buffer):
        def spec(shape, index_map, constant):
            if use_single_buffer and constant:
                # Constant index_map never re-DMAs; a second buffer is pure waste.
                return pl.BlockSpec(shape, index_map, pipeline_mode=pl.Buffered(1))
            return pl.BlockSpec(shape, index_map)

        in_specs = [
            pl.BlockSpec((tile_m, d_model), lambda i, j: (i, 0)),        # x: streams over M
            spec((d_model, tile_ff), lambda i, j: (0, j), resident),     # W1^T chunk
            spec((1, tile_ff), lambda i, j: (0, j), resident),           # b1 chunk
            spec((tile_ff, d_model), lambda i, j: (j, 0), resident),     # W2^T chunk
            spec((1, d_model), lambda i, j: (0, 0), True),               # b2: resident
        ]
        return pl.pallas_call(
            _ffn_kernel,
            out_shape=jax.ShapeDtypeStruct((m_rows, d_model), out_dtype),
            grid=(num_m, num_ff),
            in_specs=in_specs,
            out_specs=pl.BlockSpec((tile_m, d_model), lambda i, j: (i, 0)),
            scratch_shapes=[pltpu.VMEM((tile_m, d_model), jnp.float32)],
            compiler_params=pltpu.CompilerParams(
                dimension_semantics=("parallel", "arbitrary"),
                vmem_limit_bytes=vmem_limit,
            ),
        )

    try:
        out = build(True)(x2d, w1t, b1, w2t, b2)
    except Exception:
        # Fallback if this toolchain rejects Buffered(1); only a VMEM-footprint
        # difference, not a correctness one.
        out = build(False)(x2d, w1t, b1, w2t, b2)

    return out.reshape(orig_shape)


# ------------------- parameter init (PyTorch nn.Linear style) -------------------

def init_linear(key, d_out, d_in):
    k1, k2 = jax.random.split(key)
    bound = 1.0 / math.sqrt(d_in)
    w = jax.random.uniform(k1, (d_out, d_in), jnp.float32, -bound, bound)
    b = jax.random.uniform(k2, (d_out,), jnp.float32, -bound, bound)
    return w, b


# ----------------------------- main -----------------------------

if __name__ == "__main__":
    batch, seq_len, d_model, d_ff = 2, 8, 32, 256

    key = jax.random.PRNGKey(0)
    kx, k1, k2 = jax.random.split(key, 3)

    x = jax.random.normal(kx, (batch, seq_len, d_model), jnp.float32)
    w1, b1 = init_linear(k1, d_ff, d_model)
    w2, b2 = init_linear(k2, d_model, d_ff)

    params = prepare_ffn_params(w1, b1, w2, b2)  # one-time transpose + bf16 cast

    # Small explicit tiles so the toy run exercises both grid axes
    # (2 M-steps x 2 d_ff reduction steps). Real sizes use the auto-picked tiles.
    out = feed_forward(x, params, tile_m=8, tile_ff=128)
    out = jax.block_until_ready(out)
    assert out.shape == (batch, seq_len, d_model)
    assert out.dtype == x.dtype

    # Pure-JAX f32 reference (dropout = identity in eval mode); bf16-MXU tolerance.
    ref = jnp.maximum(x @ w1.T + b1, 0.0) @ w2.T + b2
    assert jnp.allclose(out, ref, atol=5e-2, rtol=5e-2), "mismatch vs reference"

    # Ragged-M case (rows not a multiple of tile_m) with resident weights
    # (auto tile_ff): exercises the no-padding masked-store path.
    x2 = jax.random.normal(kx, (3, 7, d_model), jnp.float32)  # 21 rows
    out2 = jax.block_until_ready(feed_forward(x2, params, tile_m=8))
    ref2 = jnp.maximum(x2 @ w1.T + b1, 0.0) @ w2.T + b2
    assert jnp.allclose(out2, ref2, atol=5e-2, rtol=5e-2), "ragged-M mismatch"

    # TODO(synk): nn.Dropout is identity here (eval-mode semantics); stochastic
    # training-mode dropout is not implemented.
    print("KERNEL_OK")
</pallas_src>

<mosaic_0001>
module attributes {stable_mosaic.version = 11 : i64} {
  func.func @_ffn_kernel(%arg0: i32, %arg1: i32, %arg2: memref<8x32xf32, #tpu.memory_space<vmem>>, %arg3: memref<32x128xbf16, #tpu.memory_space<vmem>>, %arg4: memref<1x128xf32, #tpu.memory_space<vmem>>, %arg5: memref<128x32xbf16, #tpu.memory_space<vmem>>, %arg6: memref<1x32xf32, #tpu.memory_space<vmem>>, %arg7: memref<8x32xf32, #tpu.memory_space<vmem>>, %arg8: memref<8x32xf32, #tpu.memory_space<vmem>>) attributes {dimension_semantics = [#tpu.dimension_semantics<parallel>, #tpu.dimension_semantics<arbitrary>], iteration_bounds = array<i64: 2, 2>, scalar_prefetch = 0 : i64, scratch_operands = 1 : i64, tpu.core_type = #tpu.core_type<tc>, window_params = [{transform_indices = @transform_0, window_bounds = array<i64: 8, 32>}, {transform_indices = @transform_1, window_bounds = array<i64: 32, 128>}, {transform_indices = @transform_2, window_bounds = array<i64: 1, 128>}, {transform_indices = @transform_3, window_bounds = array<i64: 128, 32>}, {pipeline_mode = #tpu.pipeline_mode<synchronous>, transform_indices = @transform_4, window_bounds = array<i64: 1, 32>}, {transform_indices = @transform_5, window_bounds = array<i64: 8, 32>}]} {
    %c0_i32 = arith.constant 0 : i32
    %0 = arith.cmpi eq, %arg1, %c0_i32 : i32
    %1 = arith.extui %0 : i1 to i32
    %c0_i32_0 = arith.constant 0 : i32
    %2 = arith.cmpi ne, %1, %c0_i32_0 : i32
    scf.if %2 {
      %cst_15 = arith.constant 0.000000e+00 : f32
      %21 = vector.broadcast %cst_15 : f32 to vector<8x32xf32>
      %c0_16 = arith.constant 0 : index
      %c0_17 = arith.constant 0 : index
      %22 = vector.load %arg8[%c0_16, %c0_17] : memref<8x32xf32, #tpu.memory_space<vmem>>, vector<8x32xf32>
      tpu.vector_store %arg8[%c0_16, %c0_17], %21 {strides = array<i32>} : memref<8x32xf32, #tpu.memory_space<vmem>>, vector<8x32xf32>,
    } else {
    }
    %c0 = arith.constant 0 : index
    %c0_1 = arith.constant 0 : index
    %3 = vector.load %arg2[%c0, %c0_1] : memref<8x32xf32, #tpu.memory_space<vmem>>, vector<8x32xf32>
    %4 = arith.truncf %3 : vector<8x32xf32> to vector<8x32xbf16>
    %c0_2 = arith.constant 0 : index
    %c0_3 = arith.constant 0 : index
    %5 = vector.load %arg3[%c0_2, %c0_3] : memref<32x128xbf16, #tpu.memory_space<vmem>>, vector<32x128xbf16>
    %cst = arith.constant dense<0.000000e+00> : vector<8x128xf32>
    %6 = tpu.matmul %4, %5, %cst {dimension_numbers = #tpu.dot_dimension_numbers<[1], [0], [0], [1], [0, 0, 1, 1], [], []>} : vector<8x32xbf16>, vector<32x128xbf16>, vector<8x128xf32> -> vector<8x128xf32>
    %c0_4 = arith.constant 0 : index
    %c0_5 = arith.constant 0 : index
    %7 = vector.load %arg4[%c0_4, %c0_5] : memref<1x128xf32, #tpu.memory_space<vmem>>, vector<1x128xf32>
    %8 = vector.broadcast %7 : vector<1x128xf32> to vector<8x128xf32>
    %9 = arith.addf %6, %8 : vector<8x128xf32>
    %cst_6 = arith.constant 0.000000e+00 : f32
    %10 = vector.broadcast %cst_6 : f32 to vector<8x128xf32>
    %11 = arith.maximumf %9, %10 : vector<8x128xf32>
    %c0_7 = arith.constant 0 : index
    %c0_8 = arith.constant 0 : index
    %12 = vector.load %arg8[%c0_7, %c0_8] : memref<8x32xf32, #tpu.memory_space<vmem>>, vector<8x32xf32>
    %13 = arith.truncf %11 : vector<8x128xf32> to vector<8x128xbf16>
    %c0_9 = arith.constant 0 : index
    %c0_10 = arith.constant 0 : index
    %14 = vector.load %arg5[%c0_9, %c0_10] : memref<128x32xbf16, #tpu.memory_space<vmem>>, vector<128x32xbf16>
    %cst_11 = arith.constant dense<0.000000e+00> : vector<8x32xf32>
    %15 = tpu.matmul %13, %14, %cst_11 {dimension_numbers = #tpu.dot_dimension_numbers<[1], [0], [0], [1], [0, 0, 1, 1], [], []>} : vector<8x128xbf16>, vector<128x32xbf16>, vector<8x32xf32> -> vector<8x32xf32>
    %16 = arith.addf %12, %15 : vector<8x32xf32>
    %c0_12 = arith.constant 0 : index
    %c0_13 = arith.constant 0 : index
    %17 = vector.load %arg8[%c0_12, %c0_13] : memref<8x32xf32, #tpu.memory_space<vmem>>, vector<8x32xf32>
    tpu.vector_store %arg8[%c0_12, %c0_13], %16 {strides = array<i32>} : memref<8x32xf32, #tpu.memory_space<vmem>>, vector<8x32xf32>,
    %c1_i32 = arith.constant 1 : i32
    %18 = arith.cmpi eq, %arg1, %c1_i32 : i32
    %19 = arith.extui %18 : i1 to i32
    %c0_i32_14 = arith.constant 0 : i32
    %20 = arith.cmpi ne, %19, %c0_i32_14 : i32
    scf.if %20 {
      %c0_15 = arith.constant 0 : index
      %c0_16 = arith.constant 0 : index
      %21 = vector.load %arg8[%c0_15, %c0_16] : memref<8x32xf32, #tpu.memory_space<vmem>>, vector<8x32xf32>
      %c0_17 = arith.constant 0 : index
      %c0_18 = arith.constant 0 : index
      %22 = vector.load %arg6[%c0_17, %c0_18] : memref<1x32xf32, #tpu.memory_space<vmem>>, vector<1x32xf32>
      %23 = vector.broadcast %22 : vector<1x32xf32> to vector<8x32xf32>
      %24 = arith.addf %21, %23 : vector<8x32xf32>
      %c0_19 = arith.constant 0 : index
      %c0_20 = arith.constant 0 : index
      %25 = vector.load %arg7[%c0_19, %c0_20] : memref<8x32xf32, #tpu.memory_space<vmem>>, vector<8x32xf32>
      tpu.vector_store %arg7[%c0_19, %c0_20], %24 {strides = array<i32>} : memref<8x32xf32, #tpu.memory_space<vmem>>, vector<8x32xf32>,
    } else {
    }
    return
  }
  func.func @transform_0(%arg0: i32, %arg1: i32) -> (i32, i32) {
    %c0_i32 = arith.constant 0 : i32
    %c0_i32_0 = arith.constant 0 : i32
    return %arg0, %c0_i32 : i32, i32
  }
  func.func @transform_1(%arg0: i32, %arg1: i32) -> (i32, i32) {
    %c0_i32 = arith.constant 0 : i32
    %c0_i32_0 = arith.constant 0 : i32
    return %c0_i32, %arg1 : i32, i32
  }
  func.func @transform_2(%arg0: i32, %arg1: i32) -> (i32, i32) {
    %c0_i32 = arith.constant 0 : i32
    %c0_i32_0 = arith.constant 0 : i32
    return %c0_i32, %arg1 : i32, i32
  }
  func.func @transform_3(%arg0: i32, %arg1: i32) -> (i32, i32) {
    %c0_i32 = arith.constant 0 : i32
    %c0_i32_0 = arith.constant 0 : i32
    return %arg1, %c0_i32 : i32, i32
  }
  func.func @transform_4(%arg0: i32, %arg1: i32) -> (i32, i32) {
    %c0_i32 = arith.constant 0 : i32
    %c0_i32_0 = arith.constant 0 : i32
    %c0_i32_1 = arith.constant 0 : i32
    return %c0_i32, %c0_i32_0 : i32, i32
  }
  func.func @transform_5(%arg0: i32, %arg1: i32) -> (i32, i32) {
    %c0_i32 = arith.constant 0 : i32
    %c0_i32_0 = arith.constant 0 : i32
    return %arg0, %c0_i32 : i32, i32
  }
}

module attributes {stable_mosaic.version = 11 : i64} {
  func.func @_ffn_kernel(%arg0: i32, %arg1: i32, %arg2: memref<8x32xf32, #tpu.memory_space<vmem>>, %arg3: memref<32x128xbf16, #tpu.memory_space<vmem>>, %arg4: memref<1x128xf32, #tpu.memory_space<vmem>>, %arg5: memref<128x32xbf16, #tpu.memory_space<vmem>>, %arg6: memref<1x32xf32, #tpu.memory_space<vmem>>, %arg7: memref<8x32xf32, #tpu.memory_space<vmem>>, %arg8: memref<8x32xf32, #tpu.memory_space<vmem>>) attributes {dimension_semantics = [#tpu.dimension_semantics<parallel>, #tpu.dimension_semantics<arbitrary>], iteration_bounds = array<i64: 2, 2>, scalar_prefetch = 0 : i64, scratch_operands = 1 : i64, tpu.core_type = #tpu.core_type<tc>, window_params = [{transform_indices = @transform_0, window_bounds = array<i64: 8, 32>}, {transform_indices = @transform_1, window_bounds = array<i64: 32, 128>}, {transform_indices = @transform_2, window_bounds = array<i64: 1, 128>}, {transform_indices = @transform_3, window_bounds = array<i64: 128, 32>}, {pipeline_mode = #tpu.pipeline_mode<synchronous>, transform_indices = @transform_4, window_bounds = array<i64: 1, 32>}, {transform_indices = @transform_5, window_bounds = array<i64: 8, 32>}]} {
    %c0_i32 = arith.constant 0 : i32
    %0 = arith.cmpi eq, %arg1, %c0_i32 : i32
    %1 = arith.extui %0 : i1 to i32
    %c0_i32_0 = arith.constant 0 : i32
    %2 = arith.cmpi ne, %1, %c0_i32_0 : i32
    scf.if %2 {
      %cst_15 = arith.constant 0.000000e+00 : f32
      %21 = vector.broadcast %cst_15 : f32 to vector<8x32xf32>
      %c0_16 = arith.constant 0 : index
      %c0_17 = arith.constant 0 : index
      %22 = vector.load %arg8[%c0_16, %c0_17] : memref<8x32xf32, #tpu.memory_space<vmem>>, vector<8x32xf32>
      tpu.vector_store %arg8[%c0_16, %c0_17], %21 {strides = array<i32>} : memref<8x32xf32, #tpu.memory_space<vmem>>, vector<8x32xf32>,
    } else {
    }
    %c0 = arith.constant 0 : index
    %c0_1 = arith.constant 0 : index
    %3 = vector.load %arg2[%c0, %c0_1] : memref<8x32xf32, #tpu.memory_space<vmem>>, vector<8x32xf32>
    %4 = arith.truncf %3 : vector<8x32xf32> to vector<8x32xbf16>
    %c0_2 = arith.constant 0 : index
    %c0_3 = arith.constant 0 : index
    %5 = vector.load %arg3[%c0_2, %c0_3] : memref<32x128xbf16, #tpu.memory_space<vmem>>, vector<32x128xbf16>
    %cst = arith.constant dense<0.000000e+00> : vector<8x128xf32>
    %6 = tpu.matmul %4, %5, %cst {dimension_numbers = #tpu.dot_dimension_numbers<[1], [0], [0], [1], [0, 0, 1, 1], [], []>} : vector<8x32xbf16>, vector<32x128xbf16>, vector<8x128xf32> -> vector<8x128xf32>
    %c0_4 = arith.constant 0 : index
    %c0_5 = arith.constant 0 : index
    %7 = vector.load %arg4[%c0_4, %c0_5] : memref<1x128xf32, #tpu.memory_space<vmem>>, vector<1x128xf32>
    %8 = vector.broadcast %7 : vector<1x128xf32> to vector<8x128xf32>
    %9 = arith.addf %6, %8 : vector<8x128xf32>
    %cst_6 = arith.constant 0.000000e+00 : f32
    %10 = vector.broadcast %cst_6 : f32 to vector<8x128xf32>
    %11 = arith.maximumf %9, %10 : vector<8x128xf32>
    %c0_7 = arith.constant 0 : index
    %c0_8 = arith.constant 0 : index
    %12 = vector.load %arg8[%c0_7, %c0_8] : memref<8x32xf32, #tpu.memory_space<vmem>>, vector<8x32xf32>
    %13 = arith.truncf %11 : vector<8x128xf32> to vector<8x128xbf16>
    %c0_9 = arith.constant 0 : index
    %c0_10 = arith.constant 0 : index
    %14 = vector.load %arg5[%c0_9, %c0_10] : memref<128x32xbf16, #tpu.memory_space<vmem>>, vector<128x32xbf16>
    %cst_11 = arith.constant dense<0.000000e+00> : vector<8x32xf32>
    %15 = tpu.matmul %13, %14, %cst_11 {dimension_numbers = #tpu.dot_dimension_numbers<[1], [0], [0], [1], [0, 0, 1, 1], [], []>} : vector<8x128xbf16>, vector<128x32xbf16>, vector<8x32xf32> -> vector<8x32xf32>
    %16 = arith.addf %12, %15 : vector<8x32xf32>
    %c0_12 = arith.constant 0 : index
    %c0_13 = arith.constant 0 : index
    %17 = vector.load %arg8[%c0_12, %c0_13] : memref<8x32xf32, #tpu.memory_space<vmem>>, vector<8x32xf32>
    tpu.vector_store %arg8[%c0_12, %c0_13], %16 {strides = array<i32>} : memref<8x32xf32, #tpu.memory_space<vmem>>, vector<8x32xf32>,
    %c1_i32 = arith.constant 1 : i32
    %18 = arith.cmpi eq, %arg1, %c1_i32 : i32
    %19 = arith.extui %18 : i1 to i32
    %c0_i32_14 = arith.constant 0 : i32
    %20 = arith.cmpi ne, %19, %c0_i32_14 : i32
    scf.if %20 {
      %c0_15 = arith.constant 0 : index
      %c0_16 = arith.constant 0 : index
      %21 = vector.load %arg8[%c0_15, %c0_16] : memref<8x32xf32, #tpu.memory_space<vmem>>, vector<8x32xf32>
      %c0_17 = arith.constant 0 : index
      %c0_18 = arith.constant 0 : index
      %22 = vector.load %arg6[%c0_17, %c0_18] : memref<1x32xf32, #tpu.memory_space<vmem>>, vector<1x32xf32>
      %23 = vector.broadcast %22 : vector<1x32xf32> to vector<8x32xf32>
      %24 = arith.addf %21, %23 : vector<8x32xf32>
      %c0_19 = arith.constant 0 : index
      %c0_20 = arith.constant 0 : index
      %25 = vector.load %arg7[%c0_19, %c0_20] : memref<8x32xf32, #tpu.memory_space<vmem>>, vector<8x32xf32>
      tpu.vector_store %arg7[%c0_19, %c0_20], %24 {strides = array<i32>} : memref<8x32xf32, #tpu.memory_space<vmem>>, vector<8x32xf32>,
    } else {
    }
    return
  }
  func.func @transform_0(%arg0: i32, %arg1: i32) -> (i32, i32) {
    %c0_i32 = arith.constant 0 : i32
    %c0_i32_0 = arith.constant 0 : i32
    return %arg0, %c0_i32 : i32, i32
  }
  func.func @transform_1(%arg0: i32, %arg1: i32) -> (i32, i32) {
    %c0_i32 = arith.constant 0 : i32
    %c0_i32_0 = arith.constant 0 : i32
    return %c0_i32, %arg1 : i32, i32
  }
  func.func @transform_2(%arg0: i32, %arg1: i32) -> (i32, i32) {
    %c0_i32 = arith.constant 0 : i32
    %c0_i32_0 = arith.constant 0 : i32
    return %c0_i32, %arg1 : i32, i32
  }
  func.func @transform_3(%arg0: i32, %arg1: i32) -> (i32, i32) {
    %c0_i32 = arith.constant 0 : i32
    %c0_i32_0 = arith.constant 0 : i32
    return %arg1, %c0_i32 : i32, i32
  }
  func.func @transform_4(%arg0: i32, %arg1: i32) -> (i32, i32) {
    %c0_i32 = arith.constant 0 : i32
    %c0_i32_0 = arith.constant 0 : i32
    %c0_i32_1 = arith.constant 0 : i32
    return %c0_i32, %c0_i32_0 : i32, i32
  }
  func.func @transform_5(%arg0: i32, %arg1: i32) -> (i32, i32) {
    %c0_i32 = arith.constant 0 : i32
    %c0_i32_0 = arith.constant 0 : i32
    return %arg0, %c0_i32 : i32, i32
  }
}

</mosaic_0001>

<llo_original>
// kernel: tpu_custom_call.1
$region0: #{tpu_custom_call.1}
  #allocation0 [shape = 'u32[]', space=smem, size = 0x4, offset = 0x4, fixed_abs, tag = 'smem constant byte address 0x4 - core index']
  #allocation1 [shape = 'u32[144,128]{1,0:T(1,128)}', space=vmem, size = 0x12000, scoped, tag = 'internal scratch']
  #allocation2 [shape = 'f32[8,32]{1,0:T(8,128)}', space=vmem, size = 0x1000, scoped, tag = 'scratch operand']
  %s0 = inlined_call_operand.vmem [shape: f32[16,32], index: 0, kind: input, shape index: {}]
  %s1 = inlined_call_operand.vmem [shape: bf16[32,256], index: 1, kind: input, shape index: {}]
  %s2 = inlined_call_operand.vmem [shape: f32[1,256], index: 2, kind: input, shape index: {}]
  %s3 = inlined_call_operand.vmem [shape: bf16[256,32], index: 3, kind: input, shape index: {}]
  %s4 = inlined_call_operand.vmem [shape: f32[1,32], index: 4, kind: input, shape index: {}]
  %s5 = inlined_call_operand.hbm [shape: f32[16,32], index: 5, kind: output, shape index: {}]
  %s6 = sld [smem:[#allocation0]]
  $region102: #{tpu_custom_call.1} parent=0
    _
  %s8 = ssub.s32 1, %s6
  %s9 = scalar_select 0, %s8, %s6
  $region1: #{tpu_custom_call.1} parent=0
    #allocation3 [shape = 'u8[16384]{0}', space=vmem, size = 0x4000, scoped, tag = 'input window, operand 1']
    #allocation4 [shape = 'u8[8192]{0}', space=vmem, size = 0x2000, scoped, tag = 'output window, operand 0']
    #allocation5 [shape = 's32[2]{0}', space=sflag, size = 0x8, scoped, tag = 'scoped memory for tpu_custom_call.1']
    %10 = vsyncpa [#allocation5], 0
    %s11 = scalar_lea.sflag [#allocation5], 1
    %12 = vsyncpa %s11, 0
    loop: start=0, step=1, limit=6
    $region2: #{tpu_custom_call.1} parent=1 // loop_pre_header
      _
    $region3: #{tpu_custom_call.1} parent=1 // loop_header
      %s14 = sphi 0, %s18
      %p15 = scmp.ge.s32.totalorder %s14, 6
      %s21 = sphi 0, %s33
      %s22 = sphi 0, %s29
      %s23 = sphi 0, %s21
      %s24 = sphi 0, %s22
      %s25 = sphi 0, %s23
      %s26 = sphi 0, %s24
      %s36 = sphi 0, %s38
      %s39 = sphi 0, %s36
      %s40 = sphi 0, %s39
      %s56 = sphi 0, %s40
      %s62 = sphi 0, %s64
      %s65 = sphi 0, %s62
      %s66 = sphi 0, %s65
      %s82 = sphi 0, %s66
      %s88 = sphi 0, %s90
      %s91 = sphi 0, %s88
      %s92 = sphi 0, %s91
      %s108 = sphi 0, %s92
      %s114 = sphi 0, %s116
      %s117 = sphi 0, %s114
      %s118 = sphi 0, %s117
      %s134 = sphi 0, %s118
      %s138 = sphi 0, %s138
      %s140 = sphi 0, %s138
      %s141 = sphi 0, %s140
      %s155 = sphi 0, %s141
      %s161 = sphi 0, %s163
      %s164 = sphi 0, %s161
      %s165 = sphi 0, %s164
      %s181 = sphi 0, %s165
    $region4: #{tpu_custom_call.1} parent=1 // loop_header_branch
      %17 = sbr.rel (%p15) target = $region8
    $region5: #{tpu_custom_call.1} parent=1 // loop_body
      %s19 = ssub.s32 %s14, 1
      %s20 = ssub.s32 %s14, 2
      %s27 = sadd.s32 1, %s22
      %p28 = scmp.ge.s32.totalorder %s27, 2
      %s29 = scalar_select %p28, 0, %s27
      %s30 = sadd.s32 1, %s21
      %s31 = scalar_select %p28, %s30, %s21
      %p32 = scmp.ge.s32.totalorder %s31, 2
      %s33 = scalar_select %p32, 0, %s31
      %s34 = ssub.s32 %s21, %s33
      %p35 = scmp.eq.s32.totalorder %s34, 0
      %s37 = sadd.s32 %s36, 1
      %s38 = scalar_select %p35, %s36, %s37
      %p41 = pneg %p35
      %p42 = scmp.eq.s32.totalorder %s14, 3
      %p43 = por %p41, %p42
      %p44 = scmp.ne.s32.totalorder %s36, %s39
      %p45 = scmp.eq.s32.totalorder %s14, 0
      %p46 = por %p44, %p45
      %p47 = scmp.ne.s32.totalorder %s36, %s39
      %p48 = scmp.eq.s32.totalorder %s19, 3
      %p49 = por %p47, %p48
      %p50 = scmp.ne.s32.totalorder %s39, %s40
      %p51 = scmp.eq.s32.totalorder %s19, 0
      %p52 = por %p50, %p51
      %p53 = scmp.ne.s32.totalorder %s39, %s40
      %p54 = scmp.eq.s32.totalorder %s20, 3
      %p55 = por %p53, %p54
      %p57 = scmp.ne.s32.totalorder %s40, %s56
      %p58 = scmp.eq.s32.totalorder %s20, 0
      %p59 = por %p57, %p58
      %s60 = ssub.s32 %s22, %s29
      %p61 = scmp.eq.s32.totalorder %s60, 0
      %s63 = sadd.s32 %s62, 1
      %s64 = scalar_select %p61, %s62, %s63
      %p67 = pneg %p61
      %p68 = scmp.eq.s32.totalorder %s14, 3
      %p69 = por %p67, %p68
      %p70 = scmp.ne.s32.totalorder %s62, %s65
      %p71 = scmp.eq.s32.totalorder %s14, 0
      %p72 = por %p70, %p71
      %p73 = scmp.ne.s32.totalorder %s62, %s65
      %p74 = scmp.eq.s32.totalorder %s19, 3
      %p75 = por %p73, %p74
      %p76 = scmp.ne.s32.totalorder %s65, %s66
      %p77 = scmp.eq.s32.totalorder %s19, 0
      %p78 = por %p76, %p77
      %p79 = scmp.ne.s32.totalorder %s65, %s66
      %p80 = scmp.eq.s32.totalorder %s20, 3
      %p81 = por %p79, %p80
      %p83 = scmp.ne.s32.totalorder %s66, %s82
      %p84 = scmp.eq.s32.totalorder %s20, 0
      %p85 = por %p83, %p84
      %s86 = ssub.s32 %s22, %s29
      %p87 = scmp.eq.s32.totalorder %s86, 0
      %s89 = sadd.s32 %s88, 1
      %s90 = scalar_select %p87, %s88, %s89
      %p93 = pneg %p87
      %p94 = scmp.eq.s32.totalorder %s14, 3
      %p95 = por %p93, %p94
      %p96 = scmp.ne.s32.totalorder %s88, %s91
      %p97 = scmp.eq.s32.totalorder %s14, 0
      %p98 = por %p96, %p97
      %p99 = scmp.ne.s32.totalorder %s88, %s91
      %p100 = scmp.eq.s32.totalorder %s19, 3
      %p101 = por %p99, %p100
      %p102 = scmp.ne.s32.totalorder %s91, %s92
      %p103 = scmp.eq.s32.totalorder %s19, 0
      %p104 = por %p102, %p103
      %p105 = scmp.ne.s32.totalorder %s91, %s92
      %p106 = scmp.eq.s32.totalorder %s20, 3
      %p107 = por %p105, %p106
      %p109 = scmp.ne.s32.totalorder %s92, %s108
      %p110 = scmp.eq.s32.totalorder %s20, 0
      %p111 = por %p109, %p110
      %s112 = ssub.s32 %s22, %s29
      %p113 = scmp.eq.s32.totalorder %s112, 0
      %s115 = sadd.s32 %s114, 1
      %s116 = scalar_select %p113, %s114, %s115
      %p119 = pneg %p113
      %p120 = scmp.eq.s32.totalorder %s14, 3
      %p121 = por %p119, %p120
      %p122 = scmp.ne.s32.totalorder %s114, %s117
      %p123 = scmp.eq.s32.totalorder %s14, 0
      %p124 = por %p122, %p123
      %p125 = scmp.ne.s32.totalorder %s114, %s117
      %p126 = scmp.eq.s32.totalorder %s19, 3
      %p127 = por %p125, %p126
      %p128 = scmp.ne.s32.totalorder %s117, %s118
      %p129 = scmp.eq.s32.totalorder %s19, 0
      %p130 = por %p128, %p129
      %p131 = scmp.ne.s32.totalorder %s117, %s118
      %p132 = scmp.eq.s32.totalorder %s20, 3
      %p133 = por %p131, %p132
      %p135 = scmp.ne.s32.totalorder %s118, %s134
      %p136 = scmp.eq.s32.totalorder %s20, 0
      %p137 = por %p135, %p136
      %s139 = sadd.s32 %s138, 1
      %p142 = scmp.eq.s32.totalorder %s14, 3
      %p143 = scmp.ne.s32.totalorder %s138, %s140
      %p144 = scmp.eq.s32.totalorder %s14, 0
      %p145 = por %p143, %p144
      %p146 = scmp.ne.s32.totalorder %s138, %s140
      %p147 = scmp.eq.s32.totalorder %s19, 3
      %p148 = por %p146, %p147
      %p149 = scmp.ne.s32.totalorder %s140, %s141
      %p150 = scmp.eq.s32.totalorder %s19, 0
      %p151 = por %p149, %p150
      %p152 = scmp.ne.s32.totalorder %s140, %s141
      %p153 = scmp.eq.s32.totalorder %s20, 3
      %p154 = por %p152, %p153
      %p156 = scmp.ne.s32.totalorder %s141, %s155
      %p157 = scmp.eq.s32.totalorder %s20, 0
      %p158 = por %p156, %p157
      %s159 = ssub.s32 %s21, %s33
      %p160 = scmp.eq.s32.totalorder %s159, 0
      %s162 = sadd.s32 %s161, 1
      %s163 = scalar_select %p160, %s161, %s162
      %p166 = pneg %p160
      %p167 = scmp.eq.s32.totalorder %s14, 3
      %p168 = por %p166, %p167
      %p169 = scmp.ne.s32.totalorder %s161, %s164
      %p170 = scmp.eq.s32.totalorder %s14, 0
      %p171 = por %p169, %p170
      %p172 = scmp.ne.s32.totalorder %s161, %s164
      %p173 = scmp.eq.s32.totalorder %s19, 3
      %p174 = por %p172, %p173
      %p175 = scmp.ne.s32.totalorder %s164, %s165
      %p176 = scmp.eq.s32.totalorder %s19, 0
      %p177 = por %p175, %p176
      %p178 = scmp.ne.s32.totalorder %s164, %s165
      %p179 = scmp.eq.s32.totalorder %s20, 3
      %p180 = por %p178, %p179
      %p182 = scmp.ne.s32.totalorder %s165, %s181
      %p183 = scmp.eq.s32.totalorder %s20, 0
      %p184 = por %p182, %p183
      %p185 = scmp.le.s32.totalorder 1, %s14
      %p186 = scmp.lt.s32.totalorder %s14, 5
      %p187 = pnand %p185, %p186
      %p188 = pneg %p187
      // Predicated region
      $region9: #{tpu_custom_call.1} parent=5 // pred_check
        _
      $region10: #{tpu_custom_call.1} parent=5 // pred_check_branch
        %190 = sbr.rel (%p187) target = $region12
      $region11: #{tpu_custom_call.1} parent=5 // pred_region
        %s191 = ssub.s32 %s14, 1
        // Predicated region
        $region13: #{tpu_custom_call.1} parent=11 // pred_check
          %p192 = pneg %p151
        $region14: #{tpu_custom_call.1} parent=11 // pred_check_branch
          %194 = sbr.rel (%p192) target = $region16
        $region15: #{tpu_custom_call.1} parent=11 // pred_region
          _
        $region16: #{tpu_custom_call.1} parent=11 // pred_fallthru
          _
      $region12: #{tpu_custom_call.1} parent=5 // pred_fallthru
        _
      %p195 = scmp.lt.s32.totalorder %s14, 4
      // Predicated region
      $region17: #{tpu_custom_call.1} parent=5 // pred_check
        %p196 = pneg %p195
      $region18: #{tpu_custom_call.1} parent=5 // pred_check_branch
        %198 = sbr.rel (%p196) target = $region20
      $region19: #{tpu_custom_call.1} parent=5 // pred_region
        // Predicated region
        $region21: #{tpu_custom_call.1} parent=19 // pred_check
          %p199 = pneg %p46
        $region22: #{tpu_custom_call.1} parent=19 // pred_check_branch
          %201 = sbr.rel (%p199) target = $region24
        $region23: #{tpu_custom_call.1} parent=19 // pred_region
          %p202 = scmp.lt.s32.totalorder %s21, 1
          %s203 = scalar_select %p202, %s21, 1
          %s204 = smul.addr %s203, 8
          %s205 = scalar_lea.vmem %s0, %s204
        $region24: #{tpu_custom_call.1} parent=19 // pred_fallthru
          _
        // Predicated region
        $region25: #{tpu_custom_call.1} parent=19 // pred_check
          %p206 = pneg %p72
        $region26: #{tpu_custom_call.1} parent=19 // pred_check_branch
          %208 = sbr.rel (%p206) target = $region28
        $region27: #{tpu_custom_call.1} parent=19 // pred_region
          %s209 = sand.u32 %s62, 1
          %s210 = sand.u32 %s62, 1
          %s211 = smul.addr %s210, 16
          %s212 = scalar_lea.vmem [#allocation3], %s211
          %s213 = smul.addr %s22, 4
          %s214 = scalar_lea.vmem %s1, %s213
          // Predicated region
          $region29: #{tpu_custom_call.1} parent=27 // pred_check
            _
          $region30: #{tpu_custom_call.1} parent=27 // pred_check_branch
            %216 = sbr.rel (0) target = $region32
          $region31: #{tpu_custom_call.1} parent=27 // pred_region
            // Predicated region
            $region33: #{tpu_custom_call.1} parent=31 // pred_check
              _
            $region34: #{tpu_custom_call.1} parent=31 // pred_check_branch
              %218 = sbr.rel target = $region36
            $region35: #{tpu_custom_call.1} parent=31 // pred_region
              // Predicated region
              $region48: #{tpu_custom_call.1} parent=35 // pred_check
                _
              $region49: #{tpu_custom_call.1} parent=35 // pred_check_branch
                %239 = sbr.rel (0) target = $region51
              $region50: #{tpu_custom_call.1} parent=35 // pred_region
                loop: start=0, step=1, limit=1
                $region52: #{tpu_custom_call.1} parent=50 // loop_pre_header
                  _
                $region53: #{tpu_custom_call.1} parent=50 // loop_header
                  %s241 = sphi 0, %s245
                  %p242 = scmp.ge.s32.totalorder %s241, 1
                  %s246 = sphi %s214, %s214
                  %s247 = sphi %s212, %s212
                $region54: #{tpu_custom_call.1} parent=50 // loop_header_branch
                  %244 = sbr.rel (%p242) target = $region58
                $region55: #{tpu_custom_call.1} parent=50 // loop_body
                  _
                $region56: #{tpu_custom_call.1} parent=50 // loop_footer
                  %s245 = sadd.s32 1, %s241
                $region57: #{tpu_custom_call.1} parent=50 // loop_footer_branch
                  %240 = sbr.rel target = $region53
                $region58: #{tpu_custom_call.1} parent=50 // loop_exit
                  _
                loop: start=0, step=1, limit=1
                $region59: #{tpu_custom_call.1} parent=50 // loop_pre_header
                  _
                $region60: #{tpu_custom_call.1} parent=50 // loop_header
                  %s250 = sphi 0, %s254
                  %p251 = scmp.ge.s32.totalorder %s250, 1
                  %s255 = sphi %s214, %s214
                  %s256 = sphi %s212, %s212
                $region61: #{tpu_custom_call.1} parent=50 // loop_header_branch
                  %253 = sbr.rel (%p251) target = $region65
                $region62: #{tpu_custom_call.1} parent=50 // loop_body
                  %v257 = vld [vmem:[%s255] sm:$0xf]
                  %258 = vst [vmem:[%s256] sm:$0xf] %v257
                  %v259 = vld [vmem:[%s255 + $0x8] sm:$0xf]
                  %260 = vst [vmem:[%s256 + $0x4] sm:$0xf] %v259
                  %v261 = vld [vmem:[%s255 + $0x10] sm:$0xf]
                  %262 = vst [vmem:[%s256 + $0x8] sm:$0xf] %v261
                  %v263 = vld [vmem:[%s255 + $0x18] sm:$0xf]
                  %264 = vst [vmem:[%s256 + $0xc] sm:$0xf] %v263
                $region63: #{tpu_custom_call.1} parent=50 // loop_footer
                  %s254 = sadd.s32 1, %s250
                $region64: #{tpu_custom_call.1} parent=50 // loop_footer_branch
                  %249 = sbr.rel target = $region60
                $region65: #{tpu_custom_call.1} parent=50 // loop_exit
                  _
              $region51: #{tpu_custom_call.1} parent=35 // pred_fallthru
                _
            $region36: #{tpu_custom_call.1} parent=31 // pred_fallthru
              _
            // Predicated region
            $region37: #{tpu_custom_call.1} parent=31 // pred_check
              _
            $region38: #{tpu_custom_call.1} parent=31 // pred_check_branch
              %220 = sbr.rel (0) target = $region40
            $region39: #{tpu_custom_call.1} parent=31 // pred_region
              loop: start=0, step=1, limit=1
              $region41: #{tpu_custom_call.1} parent=39 // loop_pre_header
                _
              $region42: #{tpu_custom_call.1} parent=39 // loop_header
                %s223 = sphi 0, %s227
                %p224 = scmp.ge.s32.totalorder %s223, 1
                %s228 = sphi %s214, %s214
                %s229 = sphi %s212, %s212
              $region43: #{tpu_custom_call.1} parent=39 // loop_header_branch
                %226 = sbr.rel (%p224) target = $region47
              $region44: #{tpu_custom_call.1} parent=39 // loop_body
                %v230 = vld [vmem:[%s228] sm:$0xf]
                %231 = vst [vmem:[%s229] sm:$0xf] %v230
                %v232 = vld [vmem:[%s228 + $0x8] sm:$0xf]
                %233 = vst [vmem:[%s229 + $0x4] sm:$0xf] %v232
                %v234 = vld [vmem:[%s228 + $0x10] sm:$0xf]
                %235 = vst [vmem:[%s229 + $0x8] sm:$0xf] %v234
                %v236 = vld [vmem:[%s228 + $0x18] sm:$0xf]
                %237 = vst [vmem:[%s229 + $0xc] sm:$0xf] %v236
              $region45: #{tpu_custom_call.1} parent=39 // loop_footer
                %s227 = sadd.s32 1, %s223
              $region46: #{tpu_custom_call.1} parent=39 // loop_footer_branch
                %222 = sbr.rel target = $region42
              $region47: #{tpu_custom_call.1} parent=39 // loop_exit
                _
            $region40: #{tpu_custom_call.1} parent=31 // pred_fallthru
              _
          $region32: #{tpu_custom_call.1} parent=27 // pred_fallthru
            _
          %265 = vnop
        $region28: #{tpu_custom_call.1} parent=19 // pred_fallthru
          _
        // Predicated region
        $region66: #{tpu_custom_call.1} parent=19 // pred_check
          %p266 = pneg %p98
        $region67: #{tpu_custom_call.1} parent=19 // pred_check_branch
          %268 = sbr.rel (%p266) target = $region69
        $region68: #{tpu_custom_call.1} parent=19 // pred_region
          %p269 = scmp.lt.s32.totalorder %s22, 1
          %s270 = scalar_select %p269, %s22, 1
          %s271 = scalar_lea.vmem %s2, %s270
        $region69: #{tpu_custom_call.1} parent=19 // pred_fallthru
          _
        // Predicated region
        $region70: #{tpu_custom_call.1} parent=19 // pred_check
          %p272 = pneg %p124
        $region71: #{tpu_custom_call.1} parent=19 // pred_check_branch
          %274 = sbr.rel (%p272) target = $region73
        $region72: #{tpu_custom_call.1} parent=19 // pred_region
          %s275 = smul.u32 16, %s22
          %p276 = scmp.lt.s32.totalorder %s275, 31
          %s277 = scalar_select %p276, %s275, 31
          %s278 = smul.addr %s277, 4
          %s279 = scalar_lea.vmem %s3, %s278
          %s280 = smul.u32 16, %s22
        $region73: #{tpu_custom_call.1} parent=19 // pred_fallthru
          _
      $region20: #{tpu_custom_call.1} parent=5 // pred_fallthru
        _
      %p281 = scmp.le.s32.totalorder 1, %s14
      %p282 = scmp.lt.s32.totalorder %s14, 5
      %p283 = pnand %p281, %p282
      %p284 = pneg %p283
      // Predicated region
      $region74: #{tpu_custom_call.1} parent=5 // pred_check
        _
      $region75: #{tpu_custom_call.1} parent=5 // pred_check_branch
        %286 = sbr.rel (%p283) target = $region77
      $region76: #{tpu_custom_call.1} parent=5 // pred_region
        %s287 = ssub.s32 %s14, 1
        %s288 = sand.u32 %s65, 1
        %s289 = sand.u32 %s65, 1
        %s290 = smul.addr %s289, 16
        %s291 = scalar_lea.vmem [#allocation3], %s290
        // Predicated region
        $region78: #{tpu_custom_call.1} parent=76 // pred_check
          %p292 = pneg %p78
        $region79: #{tpu_custom_call.1} parent=76 // pred_check_branch
          %294 = sbr.rel (%p292) target = $region81
        $region80: #{tpu_custom_call.1} parent=76 // pred_region
          _
        $region81: #{tpu_custom_call.1} parent=76 // pred_fallthru
          _
        %p295 = scmp.lt.s32.totalorder %s23, 1
        %s296 = scalar_select %p295, %s23, 1
        %s297 = smul.addr %s296, 8
        %s298 = scalar_lea.vmem %s0, %s297
        %p299 = pneg %p52
        %p300 = pneg %p49
        %s301 = sand.u32 %s65, 1
        %s302 = sand.u32 %s65, 1
        %s303 = smul.addr %s302, 16
        %s304 = scalar_lea.vmem [#allocation3], %s303
        %p305 = pneg %p78
        %p306 = pneg %p75
        %p307 = scmp.lt.s32.totalorder %s24, 1
        %s308 = scalar_select %p307, %s24, 1
        %s309 = scalar_lea.vmem %s2, %s308
        %p310 = pneg %p104
        %p311 = pneg %p101
        %s312 = smul.u32 16, %s24
        %p313 = scmp.lt.s32.totalorder %s312, 31
        %s314 = scalar_select %p313, %s312, 31
        %s315 = smul.addr %s314, 4
        %s316 = scalar_lea.vmem %s3, %s315
        %p317 = pneg %p130
        %p318 = pneg %p127
        %p319 = pneg %p151
        %p320 = pneg %p148
        %p321 = pneg %p177
        %p322 = pneg %p174
        %s323 = sand.u32 %s164, 1
        %s324 = scalar_lea.sflag [#allocation5], %s323
        %s325 = sand.u32 %s164, 1
        %s326 = smul.addr %s325, 8
        %s327 = scalar_lea.vmem [#allocation4], %s326
        %p328 = scmp.lt.s32.totalorder %s23, 1
        %s329 = scalar_select %p328, %s23, 1
        %s330 = smul.addr %s329, 8
        %s331 = scalar_lea.vmem %s0, %s330
        %p332 = scmp.lt.s32.totalorder %s24, 1
        %s333 = scalar_select %p332, %s24, 1
        %s334 = scalar_lea.vmem %s2, %s333
        %s335 = smul.u32 16, %s24
        %p336 = scmp.lt.s32.totalorder %s335, 31
        %s337 = scalar_select %p336, %s335, 31
        %s338 = smul.addr %s337, 4
        %s339 = scalar_lea.vmem %s3, %s338
        %s340 = smul.u32 16, %s24
        %p342 = scmp.eq.s32.totalorder %s24, 0
        // Predicated region
        $region82: #{tpu_custom_call.1} parent=76 // pred_check
          %p343 = pneg %p342
        $region83: #{tpu_custom_call.1} parent=76 // pred_check_branch
          %345 = sbr.rel (%p343) target = $region85
        $region84: #{tpu_custom_call.1} parent=76 // pred_region
          %vm346 = vcmask 261120
          %347 = vst.msk [vmem:[#allocation2] sm:$0xff] %vm346, 0.0
        $region85: #{tpu_custom_call.1} parent=76 // pred_fallthru
          _
        %v348 = vld [vmem:[%s331] sm:$0xff]
        %v349 = vpack.c.bf16 %v348, %v348
        %v350 = vld [vmem:[%s291] sm:$0xf]
        %v351 = vld [vmem:[%s291 + $0x4] sm:$0xf]
        %v352 = vld [vmem:[%s291 + $0x8] sm:$0xf]
        %v353 = vld [vmem:[%s291 + $0xc] sm:$0xf]
        %v354 = vld [vmem:[%s334] sm:$0x1]
        %v356 = vlaneseq
        %v357 = vshrl.u32 %v356, 7
        %v358 = vsub.s32 0, %v357
        %v359 = vrot.slane %v354, %v358
        %v365 = vunpack.c.l.b16 %v350
        %v366 = vunpack.c.l.b16 %v351
        %v367 = vunpack.c.l.b16 %v352
        %v368 = vunpack.c.l.b16 %v353
        %v369 = vpack.c.b16 %v366, %v365
        %v370 = vpack.c.b16 %v368, %v367
        %vm373 = vcmask 261120
        %v375 = vsel %vm373, %v349, 0
        %377 = vmatprep.subr.bf16.mxu0 0
        %378 = vmatpush1.bf16.msra.mxu0 %v369
        %379 = vmatprep.subr.bf16.mxu0 0
        %380 = vmatpush1.bf16.msra.mxu0 %v370
        %381 = vmatprep.subr.bf16.mxu0 0
        %382 = vmatpush1.bf16.msra.mxu0 0
        %383 = vmatprep.subr.bf16.mxu0 0
        %384 = vmatpush1.bf16.msra.mxu0 0
        %385 = vmatprep.subr.bf16.mxu0 0
        %386 = vmatpush1.bf16.msra.mxu0 0
        %387 = vmatprep.subr.bf16.mxu0 0
        %388 = vmatpush1.bf16.msra.mxu0 0
        %389 = vmatprep.subr.bf16.mxu0 0
        %390 = vmatpush1.bf16.msra.mxu0 0
        %391 = vmatprep.subr.bf16.mxu0 0
        %392 = vmatpush1.bf16.msra.mxu0 0
        %393 = vmatprep.subr.bf16.mxu0 0
        %394 = vmatpush1.bf16.msra.mxu0 0
        %395 = vmatprep.subr.bf16.mxu0 0
        %396 = vmatpush1.bf16.msra.mxu0 0
        %397 = vmatprep.subr.bf16.mxu0 0
        %398 = vmatpush1.bf16.msra.mxu0 0
        %399 = vmatprep.subr.bf16.mxu0 0
        %400 = vmatpush1.bf16.msra.mxu0 0
        %401 = vmatprep.subr.bf16.mxu0 0
        %402 = vmatpush1.bf16.msra.mxu0 0
        %403 = vmatprep.subr.bf16.mxu0 0
        %404 = vmatpush1.bf16.msra.mxu0 0
        %405 = vmatprep.subr.bf16.mxu0 0
        %406 = vmatpush1.bf16.msra.mxu0 0
        %407 = vmatprep.subr.bf16.mxu0 0
        %408 = vmatpush1.bf16.msra.mxu0 0
        %409 = vmatprep.mubr.bf16.mxu0 0
        %410 = vmatmul.mubr.bf16.gmra.mrb[0].mxu0 %v375
        %v411 = vpop.f32.mrb[0].mxu0
        %v412 = vadd.f32 %v359, %v411
        %v413 = vpop.f32.mrb[0].mxu0
        %v414 = vpop.f32.mrb[0].mxu0
        %v415 = vpop.f32.mrb[0].mxu0
        %416 = vdwg.mxu0
        %v417 = vmax.f32 %v412, 0.0
        %v418 = vld [vmem:[#allocation2] sm:$0xff]
        %v419 = vpack.c.bf16 %v417, %v417
        %v420 = vld [vmem:[%s339] sm:$0xf]
        %v421 = vld [vmem:[%s339 + $0x4] sm:$0xf]
        %v422 = vld [vmem:[%s339 + $0x8] sm:$0xf]
        %v423 = vld [vmem:[%s339 + $0xc] sm:$0xf]
        %v424 = vld [vmem:[%s339 + $0x10] sm:$0xf]
        %v425 = vld [vmem:[%s339 + $0x14] sm:$0xf]
        %v426 = vld [vmem:[%s339 + $0x18] sm:$0xf]
        %v427 = vld [vmem:[%s339 + $0x1c] sm:$0xf]
        %v428 = vld [vmem:[%s339 + $0x20] sm:$0xf]
        %v429 = vld [vmem:[%s339 + $0x24] sm:$0xf]
        %v430 = vld [vmem:[%s339 + $0x28] sm:$0xf]
        %v431 = vld [vmem:[%s339 + $0x2c] sm:$0xf]
        %v432 = vld [vmem:[%s339 + $0x30] sm:$0xf]
        %v433 = vld [vmem:[%s339 + $0x34] sm:$0xf]
        %v434 = vld [vmem:[%s339 + $0x38] sm:$0xf]
        %v435 = vld [vmem:[%s339 + $0x3c] sm:$0xf]
        %v452 = vunpack.c.l.b16 %v420
        %v453 = vunpack.c.l.b16 %v421
        %v454 = vunpack.c.l.b16 %v422
        %v455 = vunpack.c.l.b16 %v423
        %v456 = vunpack.c.l.b16 %v424
        %v457 = vunpack.c.l.b16 %v425
        %v458 = vunpack.c.l.b16 %v426
        %v459 = vunpack.c.l.b16 %v427
        %v460 = vunpack.c.l.b16 %v428
        %v461 = vunpack.c.l.b16 %v429
        %v462 = vunpack.c.l.b16 %v430
        %v463 = vunpack.c.l.b16 %v431
        %v464 = vunpack.c.l.b16 %v432
        %v465 = vunpack.c.l.b16 %v433
        %v466 = vunpack.c.l.b16 %v434
        %v467 = vunpack.c.l.b16 %v435
        %v468 = vpack.c.b16 %v453, %v452
        %v469 = vpack.c.b16 %v455, %v454
        %v470 = vpack.c.b16 %v457, %v456
        %v471 = vpack.c.b16 %v459, %v458
        %v472 = vpack.c.b16 %v461, %v460
        %v473 = vpack.c.b16 %v463, %v462
        %v474 = vpack.c.b16 %v465, %v464
        %v475 = vpack.c.b16 %v467, %v466
        %484 = vmatprep.subr.bf16.mxu0 0
        %485 = vmatpush1.bf16.msra.mxu0 %v468
        %486 = vmatprep.subr.bf16.mxu0 0
        %487 = vmatpush1.bf16.msra.mxu0 %v469
        %488 = vmatprep.subr.bf16.mxu0 0
        %489 = vmatpush1.bf16.msra.mxu0 %v470
        %490 = vmatprep.subr.bf16.mxu0 0
        %491 = vmatpush1.bf16.msra.mxu0 %v471
        %492 = vmatprep.subr.bf16.mxu0 0
        %493 = vmatpush1.bf16.msra.mxu0 %v472
        %494 = vmatprep.subr.bf16.mxu0 0
        %495 = vmatpush1.bf16.msra.mxu0 %v473
        %496 = vmatprep.subr.bf16.mxu0 0
        %497 = vmatpush1.bf16.msra.mxu0 %v474
        %498 = vmatprep.subr.bf16.mxu0 0
        %499 = vmatpush1.bf16.msra.mxu0 %v475
        %500 = vmatprep.subr.bf16.mxu0 0
        %501 = vmatpush1.bf16.msra.mxu0 0
        %502 = vmatprep.subr.bf16.mxu0 0
        %503 = vmatpush1.bf16.msra.mxu0 0
        %504 = vmatprep.subr.bf16.mxu0 0
        %505 = vmatpush1.bf16.msra.mxu0 0
        %506 = vmatprep.subr.bf16.mxu0 0
        %507 = vmatpush1.bf16.msra.mxu0 0
        %508 = vmatprep.subr.bf16.mxu0 0
        %509 = vmatpush1.bf16.msra.mxu0 0
        %510 = vmatprep.subr.bf16.mxu0 0
        %511 = vmatpush1.bf16.msra.mxu0 0
        %512 = vmatprep.subr.bf16.mxu0 0
        %513 = vmatpush1.bf16.msra.mxu0 0
        %514 = vmatprep.subr.bf16.mxu0 0
        %515 = vmatpush1.bf16.msra.mxu0 0
        %516 = vmatprep.mubr.bf16.mxu0 0
        %517 = vmatmul.mubr.bf16.gmra.mrb[0].mxu0 %v419
        %v518 = vpop.f32.mrb[0].mxu0
        %v519 = vadd.f32 0.0, %v518
        %v520 = vpop.f32.mrb[0].mxu0
        %v521 = vpop.f32.mrb[0].mxu0
        %v522 = vpop.f32.mrb[0].mxu0
        %523 = vdwg.mxu0
        %v524 = vadd.f32 %v418, %v519
        %525 = vst.msk [vmem:[#allocation2] sm:$0xff] %vm373, %v524
        %p526 = scmp.eq.s32.totalorder %s24, 1
        // Predicated region
        $region86: #{tpu_custom_call.1} parent=76 // pred_check
          %p527 = pneg %p526
        $region87: #{tpu_custom_call.1} parent=76 // pred_check_branch
          %529 = sbr.rel (%p527) target = $region89
        $region88: #{tpu_custom_call.1} parent=76 // pred_region
          %v530 = vld [vmem:[#allocation2] sm:$0xff]
          %v531 = vld [vmem:[%s4] sm:$0x1]
          %v533 = vlaneseq
          %v534 = vshrl.u32 %v533, 7
          %v535 = vsub.s32 0, %v534
          %v536 = vrot.slane %v531, %v535
          %v538 = vadd.f32 %v530, %v536
          %539 = vst.msk [vmem:[%s327] sm:$0xff] %vm373, %v538
        $region89: #{tpu_custom_call.1} parent=76 // pred_fallthru
          _
        %s540 = sand.u32 %s164, 1
        %s541 = scalar_lea.sflag [#allocation5], %s540
        %s542 = sand.u32 %s164, 1
        %s543 = smul.addr %s542, 8
        %s544 = scalar_lea.vmem [#allocation4], %s543
        // Predicated region
        $region90: #{tpu_custom_call.1} parent=76 // pred_check
          %p545 = pneg %p174
        $region91: #{tpu_custom_call.1} parent=76 // pred_check_branch
          %547 = sbr.rel (%p545) target = $region93
        $region92: #{tpu_custom_call.1} parent=76 // pred_region
          %s549 = ssub.s32 128, 128
          %550 = vsyncadd %s541, %s549
          %s551 = smul.addr %s23, 128
          %s552 = scalar_lea.hbm %s5, %s551
          %s554 = sshll.u32 %s544, 4
          %s555 = int_to_ptr.vmem [resolvable:$true] %s554
          %557 = dma.vmem_to_hbm [thread:$0]  %s555, 128, %s552, %s541
        $region93: #{tpu_custom_call.1} parent=76 // pred_fallthru
          _
      $region77: #{tpu_custom_call.1} parent=5 // pred_fallthru
        _
      %p558 = scmp.le.s32.totalorder 2, %s14
      // Predicated region
      $region94: #{tpu_custom_call.1} parent=5 // pred_check
        %p559 = pneg %p558
      $region95: #{tpu_custom_call.1} parent=5 // pred_check_branch
        %561 = sbr.rel (%p559) target = $region97
      $region96: #{tpu_custom_call.1} parent=5 // pred_region
        %s562 = ssub.s32 %s14, 2
        // Predicated region
        $region98: #{tpu_custom_call.1} parent=96 // pred_check
          %p563 = pneg %p180
        $region99: #{tpu_custom_call.1} parent=96 // pred_check_branch
          %565 = sbr.rel (%p563) target = $region101
        $region100: #{tpu_custom_call.1} parent=96 // pred_region
          %s566 = sand.u32 %s165, 1
          %s567 = scalar_lea.sflag [#allocation5], %s566
          %s568 = sand.u32 %s165, 1
          %s569 = smul.addr %s568, 8
          %s570 = scalar_lea.vmem [#allocation4], %s569
          %571 = dma.done %s567, 128
        $region101: #{tpu_custom_call.1} parent=96 // pred_fallthru
          _
      $region97: #{tpu_custom_call.1} parent=5 // pred_fallthru
        _
    $region6: #{tpu_custom_call.1} parent=1 // loop_footer
      %s18 = sadd.s32 1, %s14
    $region7: #{tpu_custom_call.1} parent=1 // loop_footer_branch
      %13 = sbr.rel target = $region3
    $region8: #{tpu_custom_call.1} parent=1 // loop_exit
      _
    %572 = vsyncpa [#allocation5], 1
    %s573 = scalar_lea.sflag [#allocation5], 1
    %574 = vsyncpa %s573, 1

// kernel: tpu_custom_call.1
$region0: #{tpu_custom_call.1}
  #allocation0 [shape = 'u32[]', space=smem, size = 0x4, offset = 0x4, fixed_abs, tag = 'smem constant byte address 0x4 - core index']
  #allocation1 [shape = 'u32[144,128]{1,0:T(1,128)}', space=vmem, size = 0x12000, scoped, tag = 'internal scratch']
  #allocation2 [shape = 'f32[8,32]{1,0:T(8,128)}', space=vmem, size = 0x1000, scoped, tag = 'scratch operand']
  %s0 = inlined_call_operand.vmem [shape: f32[16,32], index: 0, kind: input, shape index: {}]
  %s1 = inlined_call_operand.vmem [shape: bf16[32,256], index: 1, kind: input, shape index: {}]
  %s2 = inlined_call_operand.vmem [shape: f32[1,256], index: 2, kind: input, shape index: {}]
  %s3 = inlined_call_operand.vmem [shape: bf16[256,32], index: 3, kind: input, shape index: {}]
  %s4 = inlined_call_operand.vmem [shape: f32[1,32], index: 4, kind: input, shape index: {}]
  %s5 = inlined_call_operand.hbm [shape: f32[16,32], index: 5, kind: output, shape index: {}]
  %s6 = sld [smem:[#allocation0]]
  $region102: #{tpu_custom_call.1} parent=0
    _
  %s8 = ssub.s32 1, %s6
  %s9 = scalar_select 0, %s8, %s6
  $region1: #{tpu_custom_call.1} parent=0
    #allocation3 [shape = 'u8[16384]{0}', space=vmem, size = 0x4000, scoped, tag = 'input window, operand 1']
    #allocation4 [shape = 'u8[8192]{0}', space=vmem, size = 0x2000, scoped, tag = 'output window, operand 0']
    #allocation5 [shape = 's32[2]{0}', space=sflag, size = 0x8, scoped, tag = 'scoped memory for tpu_custom_call.1']
    %10 = vsyncpa [#allocation5], 0
    %s11 = scalar_lea.sflag [#allocation5], 1
    %12 = vsyncpa %s11, 0
    loop: start=0, step=1, limit=6
    $region2: #{tpu_custom_call.1} parent=1 // loop_pre_header
      _
    $region3: #{tpu_custom_call.1} parent=1 // loop_header
      %s14 = sphi 0, %s18
      %p15 = scmp.ge.s32.totalorder %s14, 6
      %s21 = sphi 0, %s33
      %s22 = sphi 0, %s29
      %s23 = sphi 0, %s21
      %s24 = sphi 0, %s22
      %s25 = sphi 0, %s23
      %s26 = sphi 0, %s24
      %s36 = sphi 0, %s38
      %s39 = sphi 0, %s36
      %s40 = sphi 0, %s39
      %s56 = sphi 0, %s40
      %s62 = sphi 0, %s64
      %s65 = sphi 0, %s62
      %s66 = sphi 0, %s65
      %s82 = sphi 0, %s66
      %s88 = sphi 0, %s90
      %s91 = sphi 0, %s88
      %s92 = sphi 0, %s91
      %s108 = sphi 0, %s92
      %s114 = sphi 0, %s116
      %s117 = sphi 0, %s114
      %s118 = sphi 0, %s117
      %s134 = sphi 0, %s118
      %s138 = sphi 0, %s138
      %s140 = sphi 0, %s138
      %s141 = sphi 0, %s140
      %s155 = sphi 0, %s141
      %s161 = sphi 0, %s163
      %s164 = sphi 0, %s161
      %s165 = sphi 0, %s164
      %s181 = sphi 0, %s165
    $region4: #{tpu_custom_call.1} parent=1 // loop_header_branch
      %17 = sbr.rel (%p15) target = $region8
    $region5: #{tpu_custom_call.1} parent=1 // loop_body
      %s19 = ssub.s32 %s14, 1
      %s20 = ssub.s32 %s14, 2
      %s27 = sadd.s32 1, %s22
      %p28 = scmp.ge.s32.totalorder %s27, 2
      %s29 = scalar_select %p28, 0, %s27
      %s30 = sadd.s32 1, %s21
      %s31 = scalar_select %p28, %s30, %s21
      %p32 = scmp.ge.s32.totalorder %s31, 2
      %s33 = scalar_select %p32, 0, %s31
      %s34 = ssub.s32 %s21, %s33
      %p35 = scmp.eq.s32.totalorder %s34, 0
      %s37 = sadd.s32 %s36, 1
      %s38 = scalar_select %p35, %s36, %s37
      %p41 = pneg %p35
      %p42 = scmp.eq.s32.totalorder %s14, 3
      %p43 = por %p41, %p42
      %p44 = scmp.ne.s32.totalorder %s36, %s39
      %p45 = scmp.eq.s32.totalorder %s14, 0
      %p46 = por %p44, %p45
      %p47 = scmp.ne.s32.totalorder %s36, %s39
      %p48 = scmp.eq.s32.totalorder %s19, 3
      %p49 = por %p47, %p48
      %p50 = scmp.ne.s32.totalorder %s39, %s40
      %p51 = scmp.eq.s32.totalorder %s19, 0
      %p52 = por %p50, %p51
      %p53 = scmp.ne.s32.totalorder %s39, %s40
      %p54 = scmp.eq.s32.totalorder %s20, 3
      %p55 = por %p53, %p54
      %p57 = scmp.ne.s32.totalorder %s40, %s56
      %p58 = scmp.eq.s32.totalorder %s20, 0
      %p59 = por %p57, %p58
      %s60 = ssub.s32 %s22, %s29
      %p61 = scmp.eq.s32.totalorder %s60, 0
      %s63 = sadd.s32 %s62, 1
      %s64 = scalar_select %p61, %s62, %s63
      %p67 = pneg %p61
      %p68 = scmp.eq.s32.totalorder %s14, 3
      %p69 = por %p67, %p68
      %p70 = scmp.ne.s32.totalorder %s62, %s65
      %p71 = scmp.eq.s32.totalorder %s14, 0
      %p72 = por %p70, %p71
      %p73 = scmp.ne.s32.totalorder %s62, %s65
      %p74 = scmp.eq.s32.totalorder %s19, 3
      %p75 = por %p73, %p74
      %p76 = scmp.ne.s32.totalorder %s65, %s66
      %p77 = scmp.eq.s32.totalorder %s19, 0
      %p78 = por %p76, %p77
      %p79 = scmp.ne.s32.totalorder %s65, %s66
      %p80 = scmp.eq.s32.totalorder %s20, 3
      %p81 = por %p79, %p80
      %p83 = scmp.ne.s32.totalorder %s66, %s82
      %p84 = scmp.eq.s32.totalorder %s20, 0
      %p85 = por %p83, %p84
      %s86 = ssub.s32 %s22, %s29
      %p87 = scmp.eq.s32.totalorder %s86, 0
      %s89 = sadd.s32 %s88, 1
      %s90 = scalar_select %p87, %s88, %s89
      %p93 = pneg %p87
      %p94 = scmp.eq.s32.totalorder %s14, 3
      %p95 = por %p93, %p94
      %p96 = scmp.ne.s32.totalorder %s88, %s91
      %p97 = scmp.eq.s32.totalorder %s14, 0
      %p98 = por %p96, %p97
      %p99 = scmp.ne.s32.totalorder %s88, %s91
      %p100 = scmp.eq.s32.totalorder %s19, 3
      %p101 = por %p99, %p100
      %p102 = scmp.ne.s32.totalorder %s91, %s92
      %p103 = scmp.eq.s32.totalorder %s19, 0
      %p104 = por %p102, %p103
      %p105 = scmp.ne.s32.totalorder %s91, %s92
      %p106 = scmp.eq.s32.totalorder %s20, 3
      %p107 = por %p105, %p106
      %p109 = scmp.ne.s32.totalorder %s92, %s108
      %p110 = scmp.eq.s32.totalorder %s20, 0
      %p111 = por %p109, %p110
      %s112 = ssub.s32 %s22, %s29
      %p113 = scmp.eq.s32.totalorder %s112, 0
      %s115 = sadd.s32 %s114, 1
      %s116 = scalar_select %p113, %s114, %s115
      %p119 = pneg %p113
      %p120 = scmp.eq.s32.totalorder %s14, 3
      %p121 = por %p119, %p120
      %p122 = scmp.ne.s32.totalorder %s114, %s117
      %p123 = scmp.eq.s32.totalorder %s14, 0
      %p124 = por %p122, %p123
      %p125 = scmp.ne.s32.totalorder %s114, %s117
      %p126 = scmp.eq.s32.totalorder %s19, 3
      %p127 = por %p125, %p126
      %p128 = scmp.ne.s32.totalorder %s117, %s118
      %p129 = scmp.eq.s32.totalorder %s19, 0
      %p130 = por %p128, %p129
      %p131 = scmp.ne.s32.totalorder %s117, %s118
      %p132 = scmp.eq.s32.totalorder %s20, 3
      %p133 = por %p131, %p132
      %p135 = scmp.ne.s32.totalorder %s118, %s134
      %p136 = scmp.eq.s32.totalorder %s20, 0
      %p137 = por %p135, %p136
      %s139 = sadd.s32 %s138, 1
      %p142 = scmp.eq.s32.totalorder %s14, 3
      %p143 = scmp.ne.s32.totalorder %s138, %s140
      %p144 = scmp.eq.s32.totalorder %s14, 0
      %p145 = por %p143, %p144
      %p146 = scmp.ne.s32.totalorder %s138, %s140
      %p147 = scmp.eq.s32.totalorder %s19, 3
      %p148 = por %p146, %p147
      %p149 = scmp.ne.s32.totalorder %s140, %s141
      %p150 = scmp.eq.s32.totalorder %s19, 0
      %p151 = por %p149, %p150
      %p152 = scmp.ne.s32.totalorder %s140, %s141
      %p153 = scmp.eq.s32.totalorder %s20, 3
      %p154 = por %p152, %p153
      %p156 = scmp.ne.s32.totalorder %s141, %s155
      %p157 = scmp.eq.s32.totalorder %s20, 0
      %p158 = por %p156, %p157
      %s159 = ssub.s32 %s21, %s33
      %p160 = scmp.eq.s32.totalorder %s159, 0
      %s162 = sadd.s32 %s161, 1
      %s163 = scalar_select %p160, %s161, %s162
      %p166 = pneg %p160
      %p167 = scmp.eq.s32.totalorder %s14, 3
      %p168 = por %p166, %p167
      %p169 = scmp.ne.s32.totalorder %s161, %s164
      %p170 = scmp.eq.s32.totalorder %s14, 0
      %p171 = por %p169, %p170
      %p172 = scmp.ne.s32.totalorder %s161, %s164
      %p173 = scmp.eq.s32.totalorder %s19, 3
      %p174 = por %p172, %p173
      %p175 = scmp.ne.s32.totalorder %s164, %s165
      %p176 = scmp.eq.s32.totalorder %s19, 0
      %p177 = por %p175, %p176
      %p178 = scmp.ne.s32.totalorder %s164, %s165
      %p179 = scmp.eq.s32.totalorder %s20, 3
      %p180 = por %p178, %p179
      %p182 = scmp.ne.s32.totalorder %s165, %s181
      %p183 = scmp.eq.s32.totalorder %s20, 0
      %p184 = por %p182, %p183
      %p185 = scmp.le.s32.totalorder 1, %s14
      %p186 = scmp.lt.s32.totalorder %s14, 5
      %p187 = pnand %p185, %p186
      %p188 = pneg %p187
      // Predicated region
      $region9: #{tpu_custom_call.1} parent=5 // pred_check
        _
      $region10: #{tpu_custom_call.1} parent=5 // pred_check_branch
        %190 = sbr.rel (%p187) target = $region12
      $region11: #{tpu_custom_call.1} parent=5 // pred_region
        %s191 = ssub.s32 %s14, 1
        // Predicated region
        $region13: #{tpu_custom_call.1} parent=11 // pred_check
          %p192 = pneg %p151
        $region14: #{tpu_custom_call.1} parent=11 // pred_check_branch
          %194 = sbr.rel (%p192) target = $region16
        $region15: #{tpu_custom_call.1} parent=11 // pred_region
          _
        $region16: #{tpu_custom_call.1} parent=11 // pred_fallthru
          _
      $region12: #{tpu_custom_call.1} parent=5 // pred_fallthru
        _
      %p195 = scmp.lt.s32.totalorder %s14, 4
      // Predicated region
      $region17: #{tpu_custom_call.1} parent=5 // pred_check
        %p196 = pneg %p195
      $region18: #{tpu_custom_call.1} parent=5 // pred_check_branch
        %198 = sbr.rel (%p196) target = $region20
      $region19: #{tpu_custom_call.1} parent=5 // pred_region
        // Predicated region
        $region21: #{tpu_custom_call.1} parent=19 // pred_check
          %p199 = pneg %p46
        $region22: #{tpu_custom_call.1} parent=19 // pred_check_branch
          %201 = sbr.rel (%p199) target = $region24
        $region23: #{tpu_custom_call.1} parent=19 // pred_region
          %p202 = scmp.lt.s32.totalorder %s21, 1
          %s203 = scalar_select %p202, %s21, 1
          %s204 = smul.addr %s203, 8
          %s205 = scalar_lea.vmem %s0, %s204
        $region24: #{tpu_custom_call.1} parent=19 // pred_fallthru
          _
        // Predicated region
        $region25: #{tpu_custom_call.1} parent=19 // pred_check
          %p206 = pneg %p72
        $region26: #{tpu_custom_call.1} parent=19 // pred_check_branch
          %208 = sbr.rel (%p206) target = $region28
        $region27: #{tpu_custom_call.1} parent=19 // pred_region
          %s209 = sand.u32 %s62, 1
          %s210 = sand.u32 %s62, 1
          %s211 = smul.addr %s210, 16
          %s212 = scalar_lea.vmem [#allocation3], %s211
          %s213 = smul.addr %s22, 4
          %s214 = scalar_lea.vmem %s1, %s213
          // Predicated region
          $region29: #{tpu_custom_call.1} parent=27 // pred_check
            _
          $region30: #{tpu_custom_call.1} parent=27 // pred_check_branch
            %216 = sbr.rel (0) target = $region32
          $region31: #{tpu_custom_call.1} parent=27 // pred_region
            // Predicated region
            $region33: #{tpu_custom_call.1} parent=31 // pred_check
              _
            $region34: #{tpu_custom_call.1} parent=31 // pred_check_branch
              %218 = sbr.rel target = $region36
            $region35: #{tpu_custom_call.1} parent=31 // pred_region
              // Predicated region
              $region48: #{tpu_custom_call.1} parent=35 // pred_check
                _
              $region49: #{tpu_custom_call.1} parent=35 // pred_check_branch
                %239 = sbr.rel (0) target = $region51
              $region50: #{tpu_custom_call.1} parent=35 // pred_region
                loop: start=0, step=1, limit=1
                $region52: #{tpu_custom_call.1} parent=50 // loop_pre_header
                  _
                $region53: #{tpu_custom_call.1} parent=50 // loop_header
                  %s241 = sphi 0, %s245
                  %p242 = scmp.ge.s32.totalorder %s241, 1
                  %s246 = sphi %s214, %s214
                  %s247 = sphi %s212, %s212
                $region54: #{tpu_custom_call.1} parent=50 // loop_header_branch
                  %244 = sbr.rel (%p242) target = $region58
                $region55: #{tpu_custom_call.1} parent=50 // loop_body
                  _
                $region56: #{tpu_custom_call.1} parent=50 // loop_footer
                  %s245 = sadd.s32 1, %s241
                $region57: #{tpu_custom_call.1} parent=50 // loop_footer_branch
                  %240 = sbr.rel target = $region53
                $region58: #{tpu_custom_call.1} parent=50 // loop_exit
                  _
                loop: start=0, step=1, limit=1
                $region59: #{tpu_custom_call.1} parent=50 // loop_pre_header
                  _
                $region60: #{tpu_custom_call.1} parent=50 // loop_header
                  %s250 = sphi 0, %s254
                  %p251 = scmp.ge.s32.totalorder %s250, 1
                  %s255 = sphi %s214, %s214
                  %s256 = sphi %s212, %s212
                $region61: #{tpu_custom_call.1} parent=50 // loop_header_branch
                  %253 = sbr.rel (%p251) target = $region65
                $region62: #{tpu_custom_call.1} parent=50 // loop_body
                  %v257 = vld [vmem:[%s255] sm:$0xf]
                  %258 = vst [vmem:[%s256] sm:$0xf] %v257
                  %v259 = vld [vmem:[%s255 + $0x8] sm:$0xf]
                  %260 = vst [vmem:[%s256 + $0x4] sm:$0xf] %v259
                  %v261 = vld [vmem:[%s255 + $0x10] sm:$0xf]
                  %262 = vst [vmem:[%s256 + $0x8] sm:$0xf] %v261
                  %v263 = vld [vmem:[%s255 + $0x18] sm:$0xf]
                  %264 = vst [vmem:[%s256 + $0xc] sm:$0xf] %v263
                $region63: #{tpu_custom_call.1} parent=50 // loop_footer
                  %s254 = sadd.s32 1, %s250
                $region64: #{tpu_custom_call.1} parent=50 // loop_footer_branch
                  %249 = sbr.rel target = $region60
                $region65: #{tpu_custom_call.1} parent=50 // loop_exit
                  _
              $region51: #{tpu_custom_call.1} parent=35 // pred_fallthru
                _
            $region36: #{tpu_custom_call.1} parent=31 // pred_fallthru
              _
            // Predicated region
            $region37: #{tpu_custom_call.1} parent=31 // pred_check
              _
            $region38: #{tpu_custom_call.1} parent=31 // pred_check_branch
              %220 = sbr.rel (0) target = $region40
            $region39: #{tpu_custom_call.1} parent=31 // pred_region
              loop: start=0, step=1, limit=1
              $region41: #{tpu_custom_call.1} parent=39 // loop_pre_header
                _
              $region42: #{tpu_custom_call.1} parent=39 // loop_header
                %s223 = sphi 0, %s227
                %p224 = scmp.ge.s32.totalorder %s223, 1
                %s228 = sphi %s214, %s214
                %s229 = sphi %s212, %s212
              $region43: #{tpu_custom_call.1} parent=39 // loop_header_branch
                %226 = sbr.rel (%p224) target = $region47
              $region44: #{tpu_custom_call.1} parent=39 // loop_body
                %v230 = vld [vmem:[%s228] sm:$0xf]
                %231 = vst [vmem:[%s229] sm:$0xf] %v230
                %v232 = vld [vmem:[%s228 + $0x8] sm:$0xf]
                %233 = vst [vmem:[%s229 + $0x4] sm:$0xf] %v232
                %v234 = vld [vmem:[%s228 + $0x10] sm:$0xf]
                %235 = vst [vmem:[%s229 + $0x8] sm:$0xf] %v234
                %v236 = vld [vmem:[%s228 + $0x18] sm:$0xf]
                %237 = vst [vmem:[%s229 + $0xc] sm:$0xf] %v236
              $region45: #{tpu_custom_call.1} parent=39 // loop_footer
                %s227 = sadd.s32 1, %s223
              $region46: #{tpu_custom_call.1} parent=39 // loop_footer_branch
                %222 = sbr.rel target = $region42
              $region47: #{tpu_custom_call.1} parent=39 // loop_exit
                _
            $region40: #{tpu_custom_call.1} parent=31 // pred_fallthru
              _
          $region32: #{tpu_custom_call.1} parent=27 // pred_fallthru
            _
          %265 = vnop
        $region28: #{tpu_custom_call.1} parent=19 // pred_fallthru
          _
        // Predicated region
        $region66: #{tpu_custom_call.1} parent=19 // pred_check
          %p266 = pneg %p98
        $region67: #{tpu_custom_call.1} parent=19 // pred_check_branch
          %268 = sbr.rel (%p266) target = $region69
        $region68: #{tpu_custom_call.1} parent=19 // pred_region
          %p269 = scmp.lt.s32.totalorder %s22, 1
          %s270 = scalar_select %p269, %s22, 1
          %s271 = scalar_lea.vmem %s2, %s270
        $region69: #{tpu_custom_call.1} parent=19 // pred_fallthru
          _
        // Predicated region
        $region70: #{tpu_custom_call.1} parent=19 // pred_check
          %p272 = pneg %p124
        $region71: #{tpu_custom_call.1} parent=19 // pred_check_branch
          %274 = sbr.rel (%p272) target = $region73
        $region72: #{tpu_custom_call.1} parent=19 // pred_region
          %s275 = smul.u32 16, %s22
          %p276 = scmp.lt.s32.totalorder %s275, 31
          %s277 = scalar_select %p276, %s275, 31
          %s278 = smul.addr %s277, 4
          %s279 = scalar_lea.vmem %s3, %s278
          %s280 = smul.u32 16, %s22
        $region73: #{tpu_custom_call.1} parent=19 // pred_fallthru
          _
      $region20: #{tpu_custom_call.1} parent=5 // pred_fallthru
        _
      %p281 = scmp.le.s32.totalorder 1, %s14
      %p282 = scmp.lt.s32.totalorder %s14, 5
      %p283 = pnand %p281, %p282
      %p284 = pneg %p283
      // Predicated region
      $region74: #{tpu_custom_call.1} parent=5 // pred_check
        _
      $region75: #{tpu_custom_call.1} parent=5 // pred_check_branch
        %286 = sbr.rel (%p283) target = $region77
      $region76: #{tpu_custom_call.1} parent=5 // pred_region
        %s287 = ssub.s32 %s14, 1
        %s288 = sand.u32 %s65, 1
        %s289 = sand.u32 %s65, 1
        %s290 = smul.addr %s289, 16
        %s291 = scalar_lea.vmem [#allocation3], %s290
        // Predicated region
        $region78: #{tpu_custom_call.1} parent=76 // pred_check
          %p292 = pneg %p78
        $region79: #{tpu_custom_call.1} parent=76 // pred_check_branch
          %294 = sbr.rel (%p292) target = $region81
        $region80: #{tpu_custom_call.1} parent=76 // pred_region
          _
        $region81: #{tpu_custom_call.1} parent=76 // pred_fallthru
          _
        %p295 = scmp.lt.s32.totalorder %s23, 1
        %s296 = scalar_select %p295, %s23, 1
        %s297 = smul.addr %s296, 8
        %s298 = scalar_lea.vmem %s0, %s297
        %p299 = pneg %p52
        %p300 = pneg %p49
        %s301 = sand.u32 %s65, 1
        %s302 = sand.u32 %s65, 1
        %s303 = smul.addr %s302, 16
        %s304 = scalar_lea.vmem [#allocation3], %s303
        %p305 = pneg %p78
        %p306 = pneg %p75
        %p307 = scmp.lt.s32.totalorder %s24, 1
        %s308 = scalar_select %p307, %s24, 1
        %s309 = scalar_lea.vmem %s2, %s308
        %p310 = pneg %p104
        %p311 = pneg %p101
        %s312 = smul.u32 16, %s24
        %p313 = scmp.lt.s32.totalorder %s312, 31
        %s314 = scalar_select %p313, %s312, 31
        %s315 = smul.addr %s314, 4
        %s316 = scalar_lea.vmem %s3, %s315
        %p317 = pneg %p130
        %p318 = pneg %p127
        %p319 = pneg %p151
        %p320 = pneg %p148
        %p321 = pneg %p177
        %p322 = pneg %p174
        %s323 = sand.u32 %s164, 1
        %s324 = scalar_lea.sflag [#allocation5], %s323
        %s325 = sand.u32 %s164, 1
        %s326 = smul.addr %s325, 8
        %s327 = scalar_lea.vmem [#allocation4], %s326
        %p328 = scmp.lt.s32.totalorder %s23, 1
        %s329 = scalar_select %p328, %s23, 1
        %s330 = smul.addr %s329, 8
        %s331 = scalar_lea.vmem %s0, %s330
        %p332 = scmp.lt.s32.totalorder %s24, 1
        %s333 = scalar_select %p332, %s24, 1
        %s334 = scalar_lea.vmem %s2, %s333
        %s335 = smul.u32 16, %s24
        %p336 = scmp.lt.s32.totalorder %s335, 31
        %s337 = scalar_select %p336, %s335, 31
        %s338 = smul.addr %s337, 4
        %s339 = scalar_lea.vmem %s3, %s338
        %s340 = smul.u32 16, %s24
        %p342 = scmp.eq.s32.totalorder %s24, 0
        // Predicated region
        $region82: #{tpu_custom_call.1} parent=76 // pred_check
          %p343 = pneg %p342
        $region83: #{tpu_custom_call.1} parent=76 // pred_check_branch
          %345 = sbr.rel (%p343) target = $region85
        $region84: #{tpu_custom_call.1} parent=76 // pred_region
          %vm346 = vcmask 261120
          %347 = vst.msk [vmem:[#allocation2] sm:$0xff] %vm346, 0.0
        $region85: #{tpu_custom_call.1} parent=76 // pred_fallthru
          _
        %v348 = vld [vmem:[%s331] sm:$0xff]
        %v349 = vpack.c.bf16 %v348, %v348
        %v350 = vld [vmem:[%s291] sm:$0xf]
        %v351 = vld [vmem:[%s291 + $0x4] sm:$0xf]
        %v352 = vld [vmem:[%s291 + $0x8] sm:$0xf]
        %v353 = vld [vmem:[%s291 + $0xc] sm:$0xf]
        %v354 = vld [vmem:[%s334] sm:$0x1]
        %v356 = vlaneseq
        %v357 = vshrl.u32 %v356, 7
        %v358 = vsub.s32 0, %v357
        %v359 = vrot.slane %v354, %v358
        %v365 = vunpack.c.l.b16 %v350
        %v366 = vunpack.c.l.b16 %v351
        %v367 = vunpack.c.l.b16 %v352
        %v368 = vunpack.c.l.b16 %v353
        %v369 = vpack.c.b16 %v366, %v365
        %v370 = vpack.c.b16 %v368, %v367
        %vm373 = vcmask 261120
        %v375 = vsel %vm373, %v349, 0
        %377 = vmatprep.subr.bf16.mxu0 0
        %378 = vmatpush1.bf16.msra.mxu0 %v369
        %379 = vmatprep.subr.bf16.mxu0 0
        %380 = vmatpush1.bf16.msra.mxu0 %v370
        %381 = vmatprep.subr.bf16.mxu0 0
        %382 = vmatpush1.bf16.msra.mxu0 0
        %383 = vmatprep.subr.bf16.mxu0 0
        %384 = vmatpush1.bf16.msra.mxu0 0
        %385 = vmatprep.subr.bf16.mxu0 0
        %386 = vmatpush1.bf16.msra.mxu0 0
        %387 = vmatprep.subr.bf16.mxu0 0
        %388 = vmatpush1.bf16.msra.mxu0 0
        %389 = vmatprep.subr.bf16.mxu0 0
        %390 = vmatpush1.bf16.msra.mxu0 0
        %391 = vmatprep.subr.bf16.mxu0 0
        %392 = vmatpush1.bf16.msra.mxu0 0
        %393 = vmatprep.subr.bf16.mxu0 0
        %394 = vmatpush1.bf16.msra.mxu0 0
        %395 = vmatprep.subr.bf16.mxu0 0
        %396 = vmatpush1.bf16.msra.mxu0 0
        %397 = vmatprep.subr.bf16.mxu0 0
        %398 = vmatpush1.bf16.msra.mxu0 0
        %399 = vmatprep.subr.bf16.mxu0 0
        %400 = vmatpush1.bf16.msra.mxu0 0
        %401 = vmatprep.subr.bf16.mxu0 0
        %402 = vmatpush1.bf16.msra.mxu0 0
        %403 = vmatprep.subr.bf16.mxu0 0
        %404 = vmatpush1.bf16.msra.mxu0 0
        %405 = vmatprep.subr.bf16.mxu0 0
        %406 = vmatpush1.bf16.msra.mxu0 0
        %407 = vmatprep.subr.bf16.mxu0 0
        %408 = vmatpush1.bf16.msra.mxu0 0
        %409 = vmatprep.mubr.bf16.mxu0 0
        %410 = vmatmul.mubr.bf16.gmra.mrb[0].mxu0 %v375
        %v411 = vpop.f32.mrb[0].mxu0
        %v412 = vadd.f32 %v359, %v411
        %v413 = vpop.f32.mrb[0].mxu0
        %v414 = vpop.f32.mrb[0].mxu0
        %v415 = vpop.f32.mrb[0].mxu0
        %416 = vdwg.mxu0
        %v417 = vmax.f32 %v412, 0.0
        %v418 = vld [vmem:[#allocation2] sm:$0xff]
        %v419 = vpack.c.bf16 %v417, %v417
        %v420 = vld [vmem:[%s339] sm:$0xf]
        %v421 = vld [vmem:[%s339 + $0x4] sm:$0xf]
        %v422 = vld [vmem:[%s339 + $0x8] sm:$0xf]
        %v423 = vld [vmem:[%s339 + $0xc] sm:$0xf]
        %v424 = vld [vmem:[%s339 + $0x10] sm:$0xf]
        %v425 = vld [vmem:[%s339 + $0x14] sm:$0xf]
        %v426 = vld [vmem:[%s339 + $0x18] sm:$0xf]
        %v427 = vld [vmem:[%s339 + $0x1c] sm:$0xf]
        %v428 = vld [vmem:[%s339 + $0x20] sm:$0xf]
        %v429 = vld [vmem:[%s339 + $0x24] sm:$0xf]
        %v430 = vld [vmem:[%s339 + $0x28] sm:$0xf]
        %v431 = vld [vmem:[%s339 + $0x2c] sm:$0xf]
        %v432 = vld [vmem:[%s339 + $0x30] sm:$0xf]
        %v433 = vld [vmem:[%s339 + $0x34] sm:$0xf]
        %v434 = vld [vmem:[%s339 + $0x38] sm:$0xf]
        %v435 = vld [vmem:[%s339 + $0x3c] sm:$0xf]
        %v452 = vunpack.c.l.b16 %v420
        %v453 = vunpack.c.l.b16 %v421
        %v454 = vunpack.c.l.b16 %v422
        %v455 = vunpack.c.l.b16 %v423
        %v456 = vunpack.c.l.b16 %v424
        %v457 = vunpack.c.l.b16 %v425
        %v458 = vunpack.c.l.b16 %v426
        %v459 = vunpack.c.l.b16 %v427
        %v460 = vunpack.c.l.b16 %v428
        %v461 = vunpack.c.l.b16 %v429
        %v462 = vunpack.c.l.b16 %v430
        %v463 = vunpack.c.l.b16 %v431
        %v464 = vunpack.c.l.b16 %v432
        %v465 = vunpack.c.l.b16 %v433
        %v466 = vunpack.c.l.b16 %v434
        %v467 = vunpack.c.l.b16 %v435
        %v468 = vpack.c.b16 %v453, %v452
        %v469 = vpack.c.b16 %v455, %v454
        %v470 = vpack.c.b16 %v457, %v456
        %v471 = vpack.c.b16 %v459, %v458
        %v472 = vpack.c.b16 %v461, %v460
        %v473 = vpack.c.b16 %v463, %v462
        %v474 = vpack.c.b16 %v465, %v464
        %v475 = vpack.c.b16 %v467, %v466
        %484 = vmatprep.subr.bf16.mxu0 0
        %485 = vmatpush1.bf16.msra.mxu0 %v468
        %486 = vmatprep.subr.bf16.mxu0 0
        %487 = vmatpush1.bf16.msra.mxu0 %v469
        %488 = vmatprep.subr.bf16.mxu0 0
        %489 = vmatpush1.bf16.msra.mxu0 %v470
        %490 = vmatprep.subr.bf16.mxu0 0
        %491 = vmatpush1.bf16.msra.mxu0 %v471
        %492 = vmatprep.subr.bf16.mxu0 0
        %493 = vmatpush1.bf16.msra.mxu0 %v472
        %494 = vmatprep.subr.bf16.mxu0 0
        %495 = vmatpush1.bf16.msra.mxu0 %v473
        %496 = vmatprep.subr.bf16.mxu0 0
        %497 = vmatpush1.bf16.msra.mxu0 %v474
        %498 = vmatprep.subr.bf16.mxu0 0
        %499 = vmatpush1.bf16.msra.mxu0 %v475
        %500 = vmatprep.subr.bf16.mxu0 0
        %501 = vmatpush1.bf16.msra.mxu0 0
        %502 = vmatprep.subr.bf16.mxu0 0
        %503 = vmatpush1.bf16.msra.mxu0 0
        %504 = vmatprep.subr.bf16.mxu0 0
        %505 = vmatpush1.bf16.msra.mxu0 0
        %506 = vmatprep.subr.bf16.mxu0 0
        %507 = vmatpush1.bf16.msra.mxu0 0
        %508 = vmatprep.subr.bf16.mxu0 0
        %509 = vmatpush1.bf16.msra.mxu0 0
        %510 = vmatprep.subr.bf16.mxu0 0
        %511 = vmatpush1.bf16.msra.mxu0 0
        %512 = vmatprep.subr.bf16.mxu0 0
        %513 = vmatpush1.bf16.msra.mxu0 0
        %514 = vmatprep.subr.bf16.mxu0 0
        %515 = vmatpush1.bf16.msra.mxu0 0
        %516 = vmatprep.mubr.bf16.mxu0 0
        %517 = vmatmul.mubr.bf16.gmra.mrb[0].mxu0 %v419
        %v518 = vpop.f32.mrb[0].mxu0
        %v519 = vadd.f32 0.0, %v518
        %v520 = vpop.f32.mrb[0].mxu0
        %v521 = vpop.f32.mrb[0].mxu0
        %v522 = vpop.f32.mrb[0].mxu0
        %523 = vdwg.mxu0
        %v524 = vadd.f32 %v418, %v519
        %525 = vst.msk [vmem:[#allocation2] sm:$0xff] %vm373, %v524
        %p526 = scmp.eq.s32.totalorder %s24, 1
        // Predicated region
        $region86: #{tpu_custom_call.1} parent=76 // pred_check
          %p527 = pneg %p526
        $region87: #{tpu_custom_call.1} parent=76 // pred_check_branch
          %529 = sbr.rel (%p527) target = $region89
        $region88: #{tpu_custom_call.1} parent=76 // pred_region
          %v530 = vld [vmem:[#allocation2] sm:$0xff]
          %v531 = vld [vmem:[%s4] sm:$0x1]
          %v533 = vlaneseq
          %v534 = vshrl.u32 %v533, 7
          %v535 = vsub.s32 0, %v534
          %v536 = vrot.slane %v531, %v535
          %v538 = vadd.f32 %v530, %v536
          %539 = vst.msk [vmem:[%s327] sm:$0xff] %vm373, %v538
        $region89: #{tpu_custom_call.1} parent=76 // pred_fallthru
          _
        %s540 = sand.u32 %s164, 1
        %s541 = scalar_lea.sflag [#allocation5], %s540
        %s542 = sand.u32 %s164, 1
        %s543 = smul.addr %s542, 8
        %s544 = scalar_lea.vmem [#allocation4], %s543
        // Predicated region
        $region90: #{tpu_custom_call.1} parent=76 // pred_check
          %p545 = pneg %p174
        $region91: #{tpu_custom_call.1} parent=76 // pred_check_branch
          %547 = sbr.rel (%p545) target = $region93
        $region92: #{tpu_custom_call.1} parent=76 // pred_region
          %s549 = ssub.s32 128, 128
          %550 = vsyncadd %s541, %s549
          %s551 = smul.addr %s23, 128
          %s552 = scalar_lea.hbm %s5, %s551
          %s554 = sshll.u32 %s544, 4
          %s555 = int_to_ptr.vmem [resolvable:$true] %s554
          %557 = dma.vmem_to_hbm [thread:$0]  %s555, 128, %s552, %s541
        $region93: #{tpu_custom_call.1} parent=76 // pred_fallthru
          _
      $region77: #{tpu_custom_call.1} parent=5 // pred_fallthru
        _
      %p558 = scmp.le.s32.totalorder 2, %s14
      // Predicated region
      $region94: #{tpu_custom_call.1} parent=5 // pred_check
        %p559 = pneg %p558
      $region95: #{tpu_custom_call.1} parent=5 // pred_check_branch
        %561 = sbr.rel (%p559) target = $region97
      $region96: #{tpu_custom_call.1} parent=5 // pred_region
        %s562 = ssub.s32 %s14, 2
        // Predicated region
        $region98: #{tpu_custom_call.1} parent=96 // pred_check
          %p563 = pneg %p180
        $region99: #{tpu_custom_call.1} parent=96 // pred_check_branch
          %565 = sbr.rel (%p563) target = $region101
        $region100: #{tpu_custom_call.1} parent=96 // pred_region
          %s566 = sand.u32 %s165, 1
          %s567 = scalar_lea.sflag [#allocation5], %s566
          %s568 = sand.u32 %s165, 1
          %s569 = smul.addr %s568, 8
          %s570 = scalar_lea.vmem [#allocation4], %s569
          %571 = dma.done %s567, 128
        $region101: #{tpu_custom_call.1} parent=96 // pred_fallthru
          _
      $region97: #{tpu_custom_call.1} parent=5 // pred_fallthru
        _
    $region6: #{tpu_custom_call.1} parent=1 // loop_footer
      %s18 = sadd.s32 1, %s14
    $region7: #{tpu_custom_call.1} parent=1 // loop_footer_branch
      %13 = sbr.rel target = $region3
    $region8: #{tpu_custom_call.1} parent=1 // loop_exit
      _
    %572 = vsyncpa [#allocation5], 1
    %s573 = scalar_lea.sflag [#allocation5], 1
    %574 = vsyncpa %s573, 1

</llo_original>
